<compile_context>
chip_gen: v5e
topology: v5e:2x2
jax: 0.10.0
libtpu: 0.0.40
codegen_flags: <defaults>
</compile_context>

<pallas_src>
import jax
import jax.numpy as jnp
from jax.experimental import pallas as pl
from jax.experimental.pallas import tpu as pltpu


# --------------------------------------------------------------------------
# Pallas kernel: one batch element per grid step.
# --------------------------------------------------------------------------
def _mbwt_kernel(x_ref,
                 wavw_ref, llw_ref, llb_ref, convw_ref, convb_ref,
                 y_ref, pad_ref):
    _, _, hh, wh, C = x_ref.shape
    m = hh * wh
    f32 = jnp.float32
    bf16 = jnp.bfloat16

    # Re-zero only the width-2 halo ring of the shared padded scratch.  The
    # interior is fully overwritten before every use, so the ring is all that
    # must be zero.  Re-zeroing every step keeps the kernel correct when the
    # batch axis is sharded across TensorCores (per-core scratch is uninit).
    pad_ref[0:2, :, :] = jnp.zeros((2, wh + 4, C), f32)
    pad_ref[hh + 2:hh + 4, :, :] = jnp.zeros((2, wh + 4, C), f32)
    pad_ref[2:hh + 2, 0:2, :] = jnp.zeros((hh, 2, C), f32)
    pad_ref[2:hh + 2, wh + 2:wh + 4, :] = jnp.zeros((hh, 2, C), f32)

    # Phase-split input: 0->(H even, W even), 1->(even,odd), 2->(odd,even), 3->(odd,odd).
    x00 = x_ref[0, 0]
    x01 = x_ref[0, 1]
    x10 = x_ref[0, 2]
    x11 = x_ref[0, 3]

    # Haar (db1) analysis with the 0.5 factors folded into downstream weights:
    #   L = 2*ll,  H1 = 2*h1  (h1 is the only high band surviving the [:, ::3] slice).
    s = x00 + x01
    t = x10 + x11
    L = s + t
    H1 = s - t

    def im2col3(pref):
        # 3x3 tap window (pad=1): each shifted tap read exactly once into a
        # lane-contiguous (m, 9C) slab; K index = (ky*3+kx)*C + ci.
        # (wh is a multiple of 8 here, so the leading-dim merge is layout-preserving;
        #  the slab is cast to bf16 once, feeding the MXU.)
        taps = [pref[1 + ky:1 + ky + hh, 1 + kx:1 + kx + wh, :]
                for ky in range(3) for kx in range(3)]
        return jnp.concatenate(taps, axis=-1).reshape(m, 9 * C).astype(bf16)

    # ---- LL branch: fused depthwise3x3+bias+pointwise1x1+bias as ONE MXU matmul ----
    pad_ref[2:2 + hh, 2:2 + wh, :] = L
    llv = jnp.dot(im2col3(pad_ref), llw_ref[...],
                  preferred_element_type=f32) + llb_ref[...]      # = 0.5 * llv_orig

    # ---- High band: depthwise 5x5 'same' (per-channel -> VPU); 0.5, wavelet_scale
    #      and base_scale are already folded into wavw. ----
    pad_ref[2:2 + hh, 2:2 + wh, :] = H1
    acc = jnp.zeros((hh, wh, C), f32)
    for ky in range(5):
        for kx in range(5):
            acc = acc + (pad_ref[ky:ky + hh, kx:kx + wh, :]
                         * wavw_ref[ky:ky + 1, kx:kx + 1, :])
    # TODO(synk): SS2D (global_atten) has no provided definition -> identity here.

    # ---- Dense 3x3 conv C -> 3C as ONE im2col MXU matmul.  Weight columns already
    #      produce [nh1, nh2+nh3, nh2-nh3] (c/d Haar combinations pre-folded). ----
    pad_ref[2:2 + hh, 2:2 + wh, :] = acc
    nh = jnp.dot(im2col3(pad_ref), convw_ref[...],
                 preferred_element_type=f32) + convb_ref[...]     # = 0.5 * [...]

    nh1 = nh[:, 0:C]
    cc = nh[:, C:2 * C]
    dd = nh[:, 2 * C:3 * C]

    # Haar (db1) synthesis (0.5 already folded): 6 adds, one lane-dense store.
    a = llv + nh1
    b = llv - nh1
    y_ref[0] = jnp.concatenate([a + cc, a - cc, b + dd, b - dd], axis=-1)


# --------------------------------------------------------------------------
# Wrapper (NCHW in / NCHW out)
# --------------------------------------------------------------------------
def _vmem_limit_bytes():
    try:
        cap = int(pltpu.get_tpu_info().vmem_capacity_bytes)
    except Exception:
        cap = 128 * 1024 * 1024
    # ~100 MiB on 128 MiB parts (v5e/v6e), ~48 MiB on v7x's 64 MiB.
    return int(min(100 * 1024 * 1024, (cap * 3) // 4))


def mbwt_forward(x_nchw, p):
    B, C, H, W = x_nchw.shape
    hh, wh = H // 2, W // 2
    m = hh * wh
    f32 = jnp.float32

    # Single relayout pass in: NCHW -> (B, 4, hh, wh, C), phase order
    # [ (even,even), (even,odd), (odd,even), (odd,odd) ].
    xp = x_nchw.reshape(B, C, hh, 2, wh, 2)
    xp = jnp.transpose(xp, (0, 3, 5, 2, 4, 1)).reshape(B, 4, hh, wh, C)

    param_names = ["k_wav_w", "k_ll_w", "k_ll_b", "k_conv_w", "k_conv_b"]
    param_arrays = [p[n] for n in param_names]

    x_spec = pl.BlockSpec((1, 4, hh, wh, C), lambda b: (b, 0, 0, 0, 0))
    y_spec = pl.BlockSpec((1, m, 4 * C), lambda b: (b, 0, 0))

    def rep_spec(shape):
        nd = len(shape)
        return pl.BlockSpec(shape, lambda b, nd=nd: (0,) * nd)

    in_specs = [x_spec] + [rep_spec(a.shape) for a in param_arrays]

    # Advisory cost estimate (post matmul restructuring).
    flops_per_b = (2 * m * (9 * C) * C            # LL fused im2col matmul
                   + 2 * m * (9 * C) * (3 * C)    # dense 3x3 im2col matmul
                   + 2 * 25 * m * C               # 5x5 depthwise MAC (VPU)
                   + 14 * m * C)                  # Haar adds + biases + epilogue
    param_bytes = sum(int(a.size) * a.dtype.itemsize for a in param_arrays)
    bytes_accessed = 2 * B * C * H * W * 4 + param_bytes
    ce = pl.CostEstimate(flops=int(B * flops_per_b), transcendentals=0,
                         bytes_accessed=int(bytes_accessed))

    y = pl.pallas_call(
        _mbwt_kernel,
        out_shape=jax.ShapeDtypeStruct((B, m, 4 * C), f32),
        grid_spec=pltpu.PrefetchScalarGridSpec(
            num_scalar_prefetch=0,
            grid=(B,),
            in_specs=in_specs,
            out_specs=y_spec,
            scratch_shapes=[pltpu.VMEM((hh + 4, wh + 4, C), f32)]),
        compiler_params=pltpu.CompilerParams(
            dimension_semantics=("parallel",),          # megacore over batch
            vmem_limit_bytes=_vmem_limit_bytes()),
        cost_estimate=ce,
    )(xp, *param_arrays)

    # Single relayout pass out: (B, hh*wh, 4C) -> NCHW.
    y = y.reshape(B, hh, wh, 2, 2, C)                   # (b, r, c, dy, dx, ch)
    y = jnp.transpose(y, (0, 5, 1, 3, 2, 4)).reshape(B, C, H, W)
    return y


# --------------------------------------------------------------------------
# Deterministic parameter construction (shapes from MBWT.__init__)
# --------------------------------------------------------------------------
def make_params(C, key):
    ks = jax.random.split(key, 7)
    f32 = jnp.float32
    bf16 = jnp.bfloat16
    p = {}
    # PyTorch-layout tensors (used by the pure-JAX reference)
    p["dw_w_t"] = jax.random.normal(ks[0], (C, 1, 3, 3), f32) * 0.2       # depthwise
    p["dw_b"] = jax.random.normal(ks[1], (C,), f32) * 0.1
    p["pw_w_t"] = jax.random.normal(ks[2], (C, C, 1, 1), f32) * 0.2       # pointwise
    p["pw_b"] = jax.random.normal(ks[3], (C,), f32) * 0.1
    p["wav_w_t"] = jax.random.normal(ks[4], (3 * C, 1, 5, 5), f32) * 0.2  # wavelet_convs[0]
    p["conv_w_t"] = jax.random.normal(ks[5], (3 * C, C, 3, 3), f32) * 0.2 # conv
    p["conv_b"] = jax.random.normal(ks[6], (3 * C,), f32) * 0.1
    p["wav_scale"] = jnp.full((3 * C,), 0.1, f32)    # _ScaleModule(init_scale=0.1)
    p["base_scale"] = jnp.ones((C,), f32)            # _ScaleModule(init_scale=1.0)

    # ---- Kernel-layout, with every scalar constant folded into weights/biases.
    #      All compositions are done in f32; matmul weights are cast to bf16 ONCE.
    # LL branch: depthwise3x3 o pointwise1x1 fused -> (9C, C); the 0.5 Haar-analysis
    # and 0.5 Haar-synthesis factors are folded in (0.25 on W, 0.5 on b).
    dw = jnp.transpose(p["dw_w_t"][:, 0], (1, 2, 0))                      # (3,3,ci)
    pw = p["pw_w_t"][:, :, 0, 0].T                                        # (ci,co)
    w_ll = dw[:, :, :, None] * pw[None, None, :, :]                       # (3,3,ci,co)
    p["k_ll_w"] = (0.25 * w_ll).reshape(9 * C, C).astype(bf16)
    p["k_ll_b"] = (0.5 * (p["dw_b"] @ pw + p["pw_b"])).reshape(1, C)

    # 5x5 depthwise for the surviving band: fold 0.5 (analysis) * wav_scale * base_scale.
    wsel = p["wav_scale"][0::3] * p["base_scale"]                         # (C,)
    p["k_wav_w"] = (jnp.transpose(p["wav_w_t"][0::3, 0], (1, 2, 0))
                    * (0.5 * wsel)[None, None, :])                        # (5,5,C) f32

    # Dense conv (3C,C,3,3), oc = co*3 + band -> (9C, 3C) with K=(ky*3+kx)*C+ci,
    # N = band*C + co; fold the 0.5 synthesis factor and the c/d Haar combinations.
    w5 = p["conv_w_t"].reshape(C, 3, C, 3, 3)                             # (co,band,ci,ky,kx)
    wc = jnp.transpose(w5, (3, 4, 2, 1, 0)).reshape(9 * C, 3 * C) * 0.5   # (9C,3C)
    w1, w2, w3 = wc[:, 0:C], wc[:, C:2 * C], wc[:, 2 * C:3 * C]
    p["k_conv_w"] = jnp.concatenate([w1, w2 + w3, w2 - w3], axis=1).astype(bf16)
    bc = p["conv_b"].reshape(C, 3).T * 0.5                                # (band,co)
    p["k_conv_b"] = jnp.concatenate([bc[0], bc[1] + bc[2], bc[1] - bc[2]]).reshape(1, 3 * C)
    return p


# --------------------------------------------------------------------------
# Pure-JAX reference mirroring the PyTorch forward (NCHW) for validation
# --------------------------------------------------------------------------
def _conv2d_nchw(x, w, b=None, stride=1, padding=0, groups=1):
    out = jax.lax.conv_general_dilated(
        x, w, window_strides=(stride, stride),
        padding=((padding, padding), (padding, padding)),
        dimension_numbers=("NCHW", "OIHW", "NCHW"),
        feature_group_count=groups,
        precision=jax.lax.Precision.HIGHEST)
    if b is not None:
        out = out + b[None, :, None, None]
    return out


def mbwt_reference(x, p):
    B, C, H, W = x.shape
    hh, wh = H // 2, W // 2
    s = 0.7071067811865476
    dec_lo = jnp.array([s, s], jnp.float32)
    dec_hi = jnp.array([s, -s], jnp.float32)
    rec_lo = jnp.array([s, s], jnp.float32)
    rec_hi = jnp.array([s, -s], jnp.float32)
    outer = lambda a, b: a[:, None] * b[None, :]
    dec = jnp.stack([outer(dec_lo, dec_lo), outer(dec_hi, dec_lo),
                     outer(dec_lo, dec_hi), outer(dec_hi, dec_hi)], 0)
    rec = jnp.stack([outer(rec_lo, rec_lo), outer(rec_hi, rec_lo),
                     outer(rec_lo, rec_hi), outer(rec_hi, rec_hi)], 0)
    wt_filter = jnp.tile(dec[:, None], (C, 1, 1, 1))    # (4C,1,2,2)
    iwt_filter = jnp.tile(rec[:, None], (C, 1, 1, 1))   # (4C,1,2,2)

    cw = _conv2d_nchw(x, wt_filter, stride=2, padding=0, groups=C).reshape(B, C, 4, hh, wh)
    ll, xh = cw[:, :, 0], cw[:, :, 1:4]

    ll = _conv2d_nchw(ll, p["dw_w_t"], p["dw_b"], padding=1, groups=C)
    ll = _conv2d_nchw(ll, p["pw_w_t"], p["pw_b"])

    xt = xh.reshape(B, C * 3, hh, wh)
    xt = _conv2d_nchw(xt, p["wav_w_t"], None, padding=2, groups=C * 3)
    xt = xt * p["wav_scale"][None, :, None, None]
    g = xt[:, ::3]                                   # select -> SS2D (identity)
    g = g * p["base_scale"][None, :, None, None]
    ht = _conv2d_nchw(g, p["conv_w_t"], p["conv_b"], padding=1).reshape(B, C, 3, hh, wh)

    cur = jnp.concatenate([ll[:, :, None], ht], axis=2).reshape(B, 4 * C, hh, wh)
    wT = iwt_filter[:, 0, ::-1, ::-1].reshape(C, 4, 2, 2)   # conv_transpose as dilated conv
    y = jax.lax.conv_general_dilated(
        cur, wT, window_strides=(1, 1), padding=((1, 1), (1, 1)),
        lhs_dilation=(2, 2), dimension_numbers=("NCHW", "OIHW", "NCHW"),
        feature_group_count=C, precision=jax.lax.Precision.HIGHEST)
    return y


# --------------------------------------------------------------------------
if __name__ == "__main__":
    B, C, H, W = 2, 4, 16, 16
    key = jax.random.PRNGKey(0)
    kx, kp = jax.random.split(key)
    x = jax.random.normal(kx, (B, C, H, W), jnp.float32)
    params = make_params(C, kp)

    y = mbwt_forward(x, params)
    y = jax.block_until_ready(y)

    y_ref = mbwt_reference(x, params)
    assert y.shape == (B, C, H, W)
    max_err = float(jnp.max(jnp.abs(y - y_ref)))
    # bf16 matmul operands introduce a small (<~1e-2) deviation vs the f32 reference.
    assert max_err < 3e-2, f"mismatch vs reference: max abs err = {max_err}"
    print("KERNEL_OK")
</pallas_src>

<mosaic_0001>
module attributes {stable_mosaic.version = 11 : i64} {
  func.func @_mbwt_kernel(%arg0: i32, %arg1: memref<1x4x8x8x4xf32, #tpu.memory_space<vmem>>, %arg2: memref<5x5x4xf32, #tpu.memory_space<vmem>>, %arg3: memref<36x4xbf16, #tpu.memory_space<vmem>>, %arg4: memref<1x4xf32, #tpu.memory_space<vmem>>, %arg5: memref<36x12xbf16, #tpu.memory_space<vmem>>, %arg6: memref<1x12xf32, #tpu.memory_space<vmem>>, %arg7: memref<1x64x16xf32, #tpu.memory_space<vmem>>, %arg8: memref<12x12x4xf32, #tpu.memory_space<vmem>>) attributes {dimension_semantics = [#tpu.dimension_semantics<parallel>], iteration_bounds = array<i64: 2>, scalar_prefetch = 0 : i64, scratch_operands = 1 : i64, tpu.core_type = #tpu.core_type<tc>, window_params = [{transform_indices = @transform_0, window_bounds = array<i64: 1, 4, 8, 8, 4>}, {pipeline_mode = #tpu.pipeline_mode<synchronous>, transform_indices = @transform_1, window_bounds = array<i64: 5, 5, 4>}, {pipeline_mode = #tpu.pipeline_mode<synchronous>, transform_indices = @transform_2, window_bounds = array<i64: 36, 4>}, {pipeline_mode = #tpu.pipeline_mode<synchronous>, transform_indices = @transform_3, window_bounds = array<i64: 1, 4>}, {pipeline_mode = #tpu.pipeline_mode<synchronous>, transform_indices = @transform_4, window_bounds = array<i64: 36, 12>}, {pipeline_mode = #tpu.pipeline_mode<synchronous>, transform_indices = @transform_5, window_bounds = array<i64: 1, 12>}, {transform_indices = @transform_6, window_bounds = array<i64: 1, 64, 16>}]} {
    %cst = arith.constant 0.000000e+00 : f32
    %0 = vector.broadcast %cst : f32 to vector<2x12x4xf32>
    %c0 = arith.constant 0 : index
    %c0_0 = arith.constant 0 : index
    %c0_1 = arith.constant 0 : index
    %1 = vector.load %arg8[%c0, %c0_0, %c0_1] : memref<12x12x4xf32, #tpu.memory_space<vmem>>, vector<2x12x4xf32>
    tpu.vector_store %arg8[%c0, %c0_0, %c0_1], %0 {strides = array<i32>} : memref<12x12x4xf32, #tpu.memory_space<vmem>>, vector<2x12x4xf32>,
    %cst_2 = arith.constant 0.000000e+00 : f32
    %2 = vector.broadcast %cst_2 : f32 to vector<2x12x4xf32>
    %c10 = arith.constant 10 : index
    %c0_3 = arith.constant 0 : index
    %c0_4 = arith.constant 0 : index
    %3 = vector.load %arg8[%c10, %c0_3, %c0_4] : memref<12x12x4xf32, #tpu.memory_space<vmem>>, vector<2x12x4xf32>
    tpu.vector_store %arg8[%c10, %c0_3, %c0_4], %2 {strides = array<i32>} : memref<12x12x4xf32, #tpu.memory_space<vmem>>, vector<2x12x4xf32>,
    %cst_5 = arith.constant 0.000000e+00 : f32
    %4 = vector.broadcast %cst_5 : f32 to vector<8x2x4xf32>
    %c2 = arith.constant 2 : index
    %c0_6 = arith.constant 0 : index
    %c0_7 = arith.constant 0 : index
    %5 = vector.load %arg8[%c2, %c0_6, %c0_7] : memref<12x12x4xf32, #tpu.memory_space<vmem>>, vector<8x2x4xf32>
    tpu.vector_store %arg8[%c2, %c0_6, %c0_7], %4 {strides = array<i32>} : memref<12x12x4xf32, #tpu.memory_space<vmem>>, vector<8x2x4xf32>,
    %cst_8 = arith.constant 0.000000e+00 : f32
    %6 = vector.broadcast %cst_8 : f32 to vector<8x2x4xf32>
    %c2_9 = arith.constant 2 : index
    %c10_10 = arith.constant 10 : index
    %c0_11 = arith.constant 0 : index
    %7 = vector.load %arg8[%c2_9, %c10_10, %c0_11] : memref<12x12x4xf32, #tpu.memory_space<vmem>>, vector<8x2x4xf32>
    tpu.vector_store %arg8[%c2_9, %c10_10, %c0_11], %6 {strides = array<i32>} : memref<12x12x4xf32, #tpu.memory_space<vmem>>, vector<8x2x4xf32>,
    %c0_12 = arith.constant 0 : index
    %c0_13 = arith.constant 0 : index
    %c0_14 = arith.constant 0 : index
    %c0_15 = arith.constant 0 : index
    %c0_16 = arith.constant 0 : index
    %8 = vector.load %arg1[%c0_12, %c0_13, %c0_14, %c0_15, %c0_16] : memref<1x4x8x8x4xf32, #tpu.memory_space<vmem>>, vector<1x1x8x8x4xf32>
    %9 = vector.shape_cast %8 : vector<1x1x8x8x4xf32> to vector<8x8x4xf32>
    %c0_17 = arith.constant 0 : index
    %c1 = arith.constant 1 : index
    %c0_18 = arith.constant 0 : index
    %c0_19 = arith.constant 0 : index
    %c0_20 = arith.constant 0 : index
    %10 = vector.load %arg1[%c0_17, %c1, %c0_18, %c0_19, %c0_20] : memref<1x4x8x8x4xf32, #tpu.memory_space<vmem>>, vector<1x1x8x8x4xf32>
    %11 = vector.shape_cast %10 : vector<1x1x8x8x4xf32> to vector<8x8x4xf32>
    %c0_21 = arith.constant 0 : index
    %c2_22 = arith.constant 2 : index
    %c0_23 = arith.constant 0 : index
    %c0_24 = arith.constant 0 : index
    %c0_25 = arith.constant 0 : index
    %12 = vector.load %arg1[%c0_21, %c2_22, %c0_23, %c0_24, %c0_25] : memref<1x4x8x8x4xf32, #tpu.memory_space<vmem>>, vector<1x1x8x8x4xf32>
    %13 = vector.shape_cast %12 : vector<1x1x8x8x4xf32> to vector<8x8x4xf32>
    %c0_26 = arith.constant 0 : index
    %c3 = arith.constant 3 : index
    %c0_27 = arith.constant 0 : index
    %c0_28 = arith.constant 0 : index
    %c0_29 = arith.constant 0 : index
    %14 = vector.load %arg1[%c0_26, %c3, %c0_27, %c0_28, %c0_29] : memref<1x4x8x8x4xf32, #tpu.memory_space<vmem>>, vector<1x1x8x8x4xf32>
    %15 = vector.shape_cast %14 : vector<1x1x8x8x4xf32> to vector<8x8x4xf32>
    %16 = arith.addf %9, %11 : vector<8x8x4xf32>
    %17 = arith.addf %13, %15 : vector<8x8x4xf32>
    %18 = arith.addf %16, %17 : vector<8x8x4xf32>
    %19 = arith.subf %16, %17 : vector<8x8x4xf32>
    %c2_30 = arith.constant 2 : index
    %c2_31 = arith.constant 2 : index
    %c0_32 = arith.constant 0 : index
    %20 = vector.load %arg8[%c2_30, %c2_31, %c0_32] : memref<12x12x4xf32, #tpu.memory_space<vmem>>, vector<8x8x4xf32>
    tpu.vector_store %arg8[%c2_30, %c2_31, %c0_32], %18 {strides = array<i32>} : memref<12x12x4xf32, #tpu.memory_space<vmem>>, vector<8x8x4xf32>,
    %c1_33 = arith.constant 1 : index
    %c1_34 = arith.constant 1 : index
    %c0_35 = arith.constant 0 : index
    %21 = vector.load %arg8[%c1_33, %c1_34, %c0_35] : memref<12x12x4xf32, #tpu.memory_space<vmem>>, vector<8x8x4xf32>
    %c1_36 = arith.constant 1 : index
    %c2_37 = arith.constant 2 : index
    %c0_38 = arith.constant 0 : index
    %22 = vector.load %arg8[%c1_36, %c2_37, %c0_38] : memref<12x12x4xf32, #tpu.memory_space<vmem>>, vector<8x8x4xf32>
    %c1_39 = arith.constant 1 : index
    %c3_40 = arith.constant 3 : index
    %c0_41 = arith.constant 0 : index
    %23 = vector.load %arg8[%c1_39, %c3_40, %c0_41] : memref<12x12x4xf32, #tpu.memory_space<vmem>>, vector<8x8x4xf32>
    %c2_42 = arith.constant 2 : index
    %c1_43 = arith.constant 1 : index
    %c0_44 = arith.constant 0 : index
    %24 = vector.load %arg8[%c2_42, %c1_43, %c0_44] : memref<12x12x4xf32, #tpu.memory_space<vmem>>, vector<8x8x4xf32>
    %c2_45 = arith.constant 2 : index
    %c2_46 = arith.constant 2 : index
    %c0_47 = arith.constant 0 : index
    %25 = vector.load %arg8[%c2_45, %c2_46, %c0_47] : memref<12x12x4xf32, #tpu.memory_space<vmem>>, vector<8x8x4xf32>
    %c2_48 = arith.constant 2 : index
    %c3_49 = arith.constant 3 : index
    %c0_50 = arith.constant 0 : index
    %26 = vector.load %arg8[%c2_48, %c3_49, %c0_50] : memref<12x12x4xf32, #tpu.memory_space<vmem>>, vector<8x8x4xf32>
    %c3_51 = arith.constant 3 : index
    %c1_52 = arith.constant 1 : index
    %c0_53 = arith.constant 0 : index
    %27 = vector.load %arg8[%c3_51, %c1_52, %c0_53] : memref<12x12x4xf32, #tpu.memory_space<vmem>>, vector<8x8x4xf32>
    %c3_54 = arith.constant 3 : index
    %c2_55 = arith.constant 2 : index
    %c0_56 = arith.constant 0 : index
    %28 = vector.load %arg8[%c3_54, %c2_55, %c0_56] : memref<12x12x4xf32, #tpu.memory_space<vmem>>, vector<8x8x4xf32>
    %c3_57 = arith.constant 3 : index
    %c3_58 = arith.constant 3 : index
    %c0_59 = arith.constant 0 : index
    %29 = vector.load %arg8[%c3_57, %c3_58, %c0_59] : memref<12x12x4xf32, #tpu.memory_space<vmem>>, vector<8x8x4xf32>
    %30 = tpu.concatenate %21, %22, %23, %24, %25, %26, %27, %28, %29 in 2 : vector<8x8x4xf32>, vector<8x8x4xf32>, vector<8x8x4xf32>, vector<8x8x4xf32>, vector<8x8x4xf32>, vector<8x8x4xf32>, vector<8x8x4xf32>, vector<8x8x4xf32>, vector<8x8x4xf32> -> vector<8x8x36xf32>
    %31 = vector.shape_cast %30 : vector<8x8x36xf32> to vector<64x36xf32>
    %32 = arith.truncf %31 : vector<64x36xf32> to vector<64x36xbf16>
    %c0_60 = arith.constant 0 : index
    %c0_61 = arith.constant 0 : index
    %33 = vector.load %arg3[%c0_60, %c0_61] : memref<36x4xbf16, #tpu.memory_space<vmem>>, vector<36x4xbf16>
    %cst_62 = arith.constant dense<0.000000e+00> : vector<64x4xf32>
    %34 = tpu.matmul %32, %33, %cst_62 {dimension_numbers = #tpu.dot_dimension_numbers<[1], [0], [0], [1], [0, 0, 1, 1], [], []>} : vector<64x36xbf16>, vector<36x4xbf16>, vector<64x4xf32> -> vector<64x4xf32>
    %c0_63 = arith.constant 0 : index
    %c0_64 = arith.constant 0 : index
    %35 = vector.load %arg4[%c0_63, %c0_64] : memref<1x4xf32, #tpu.memory_space<vmem>>, vector<1x4xf32>
    %36 = vector.broadcast %35 : vector<1x4xf32> to vector<64x4xf32>
    %37 = arith.addf %34, %36 : vector<64x4xf32>
    %c2_65 = arith.constant 2 : index
    %c2_66 = arith.constant 2 : index
    %c0_67 = arith.constant 0 : index
    %38 = vector.load %arg8[%c2_65, %c2_66, %c0_67] : memref<12x12x4xf32, #tpu.memory_space<vmem>>, vector<8x8x4xf32>
    tpu.vector_store %arg8[%c2_65, %c2_66, %c0_67], %19 {strides = array<i32>} : memref<12x12x4xf32, #tpu.memory_space<vmem>>, vector<8x8x4xf32>,
    %cst_68 = arith.constant 0.000000e+00 : f32
    %39 = vector.broadcast %cst_68 : f32 to vector<8x8x4xf32>
    %c0_69 = arith.constant 0 : index
    %c0_70 = arith.constant 0 : index
    %c0_71 = arith.constant 0 : index
    %40 = vector.load %arg8[%c0_69, %c0_70, %c0_71] : memref<12x12x4xf32, #tpu.memory_space<vmem>>, vector<8x8x4xf32>
    %c0_72 = arith.constant 0 : index
    %c0_73 = arith.constant 0 : index
    %c0_74 = arith.constant 0 : index
    %41 = vector.load %arg2[%c0_72, %c0_73, %c0_74] : memref<5x5x4xf32, #tpu.memory_space<vmem>>, vector<1x1x4xf32>
    %42 = vector.broadcast %41 : vector<1x1x4xf32> to vector<8x8x4xf32>
    %43 = arith.mulf %40, %42 : vector<8x8x4xf32>
    %44 = arith.addf %39, %43 : vector<8x8x4xf32>
    %c0_75 = arith.constant 0 : index
    %c1_76 = arith.constant 1 : index
    %c0_77 = arith.constant 0 : index
    %45 = vector.load %arg8[%c0_75, %c1_76, %c0_77] : memref<12x12x4xf32, #tpu.memory_space<vmem>>, vector<8x8x4xf32>
    %c0_78 = arith.constant 0 : index
    %c1_79 = arith.constant 1 : index
    %c0_80 = arith.constant 0 : index
    %46 = vector.load %arg2[%c0_78, %c1_79, %c0_80] : memref<5x5x4xf32, #tpu.memory_space<vmem>>, vector<1x1x4xf32>
    %47 = vector.broadcast %46 : vector<1x1x4xf32> to vector<8x8x4xf32>
    %48 = arith.mulf %45, %47 : vector<8x8x4xf32>
    %49 = arith.addf %44, %48 : vector<8x8x4xf32>
    %c0_81 = arith.constant 0 : index
    %c2_82 = arith.constant 2 : index
    %c0_83 = arith.constant 0 : index
    %50 = vector.load %arg8[%c0_81, %c2_82, %c0_83] : memref<12x12x4xf32, #tpu.memory_space<vmem>>, vector<8x8x4xf32>
    %c0_84 = arith.constant 0 : index
    %c2_85 = arith.constant 2 : index
    %c0_86 = arith.constant 0 : index
    %51 = vector.load %arg2[%c0_84, %c2_85, %c0_86] : memref<5x5x4xf32, #tpu.memory_space<vmem>>, vector<1x1x4xf32>
    %52 = vector.broadcast %51 : vector<1x1x4xf32> to vector<8x8x4xf32>
    %53 = arith.mulf %50, %52 : vector<8x8x4xf32>
    %54 = arith.addf %49, %53 : vector<8x8x4xf32>
    %c0_87 = arith.constant 0 : index
    %c3_88 = arith.constant 3 : index
    %c0_89 = arith.constant 0 : index
    %55 = vector.load %arg8[%c0_87, %c3_88, %c0_89] : memref<12x12x4xf32, #tpu.memory_space<vmem>>, vector<8x8x4xf32>
    %c0_90 = arith.constant 0 : index
    %c3_91 = arith.constant 3 : index
    %c0_92 = arith.constant 0 : index
    %56 = vector.load %arg2[%c0_90, %c3_91, %c0_92] : memref<5x5x4xf32, #tpu.memory_space<vmem>>, vector<1x1x4xf32>
    %57 = vector.broadcast %56 : vector<1x1x4xf32> to vector<8x8x4xf32>
    %58 = arith.mulf %55, %57 : vector<8x8x4xf32>
    %59 = arith.addf %54, %58 : vector<8x8x4xf32>
    %c0_93 = arith.constant 0 : index
    %c4 = arith.constant 4 : index
    %c0_94 = arith.constant 0 : index
    %60 = vector.load %arg8[%c0_93, %c4, %c0_94] : memref<12x12x4xf32, #tpu.memory_space<vmem>>, vector<8x8x4xf32>
    %c0_95 = arith.constant 0 : index
    %c4_96 = arith.constant 4 : index
    %c0_97 = arith.constant 0 : index
    %61 = vector.load %arg2[%c0_95, %c4_96, %c0_97] : memref<5x5x4xf32, #tpu.memory_space<vmem>>, vector<1x1x4xf32>
    %62 = vector.broadcast %61 : vector<1x1x4xf32> to vector<8x8x4xf32>
    %63 = arith.mulf %60, %62 : vector<8x8x4xf32>
    %64 = arith.addf %59, %63 : vector<8x8x4xf32>
    %c1_98 = arith.constant 1 : index
    %c0_99 = arith.constant 0 : index
    %c0_100 = arith.constant 0 : index
    %65 = vector.load %arg8[%c1_98, %c0_99, %c0_100] : memref<12x12x4xf32, #tpu.memory_space<vmem>>, vector<8x8x4xf32>
    %c1_101 = arith.constant 1 : index
    %c0_102 = arith.constant 0 : index
    %c0_103 = arith.constant 0 : index
    %66 = vector.load %arg2[%c1_101, %c0_102, %c0_103] : memref<5x5x4xf32, #tpu.memory_space<vmem>>, vector<1x1x4xf32>
    %67 = vector.broadcast %66 : vector<1x1x4xf32> to vector<8x8x4xf32>
    %68 = arith.mulf %65, %67 : vector<8x8x4xf32>
    %69 = arith.addf %64, %68 : vector<8x8x4xf32>
    %c1_104 = arith.constant 1 : index
    %c1_105 = arith.constant 1 : index
    %c0_106 = arith.constant 0 : index
    %70 = vector.load %arg8[%c1_104, %c1_105, %c0_106] : memref<12x12x4xf32, #tpu.memory_space<vmem>>, vector<8x8x4xf32>
    %c1_107 = arith.constant 1 : index
    %c1_108 = arith.constant 1 : index
    %c0_109 = arith.constant 0 : index
    %71 = vector.load %arg2[%c1_107, %c1_108, %c0_109] : memref<5x5x4xf32, #tpu.memory_space<vmem>>, vector<1x1x4xf32>
    %72 = vector.broadcast %71 : vector<1x1x4xf32> to vector<8x8x4xf32>
    %73 = arith.mulf %70, %72 : vector<8x8x4xf32>
    %74 = arith.addf %69, %73 : vector<8x8x4xf32>
    %c1_110 = arith.constant 1 : index
    %c2_111 = arith.constant 2 : index
    %c0_112 = arith.constant 0 : index
    %75 = vector.load %arg8[%c1_110, %c2_111, %c0_112] : memref<12x12x4xf32, #tpu.memory_space<vmem>>, vector<8x8x4xf32>
    %c1_113 = arith.constant 1 : index
    %c2_114 = arith.constant 2 : index
    %c0_115 = arith.constant 0 : index
    %76 = vector.load %arg2[%c1_113, %c2_114, %c0_115] : memref<5x5x4xf32, #tpu.memory_space<vmem>>, vector<1x1x4xf32>
    %77 = vector.broadcast %76 : vector<1x1x4xf32> to vector<8x8x4xf32>
    %78 = arith.mulf %75, %77 : vector<8x8x4xf32>
    %79 = arith.addf %74, %78 : vector<8x8x4xf32>
    %c1_116 = arith.constant 1 : index
    %c3_117 = arith.constant 3 : index
    %c0_118 = arith.constant 0 : index
    %80 = vector.load %arg8[%c1_116, %c3_117, %c0_118] : memref<12x12x4xf32, #tpu.memory_space<vmem>>, vector<8x8x4xf32>
    %c1_119 = arith.constant 1 : index
    %c3_120 = arith.constant 3 : index
    %c0_121 = arith.constant 0 : index
    %81 = vector.load %arg2[%c1_119, %c3_120, %c0_121] : memref<5x5x4xf32, #tpu.memory_space<vmem>>, vector<1x1x4xf32>
    %82 = vector.broadcast %81 : vector<1x1x4xf32> to vector<8x8x4xf32>
    %83 = arith.mulf %80, %82 : vector<8x8x4xf32>
    %84 = arith.addf %79, %83 : vector<8x8x4xf32>
    %c1_122 = arith.constant 1 : index
    %c4_123 = arith.constant 4 : index
    %c0_124 = arith.constant 0 : index
    %85 = vector.load %arg8[%c1_122, %c4_123, %c0_124] : memref<12x12x4xf32, #tpu.memory_space<vmem>>, vector<8x8x4xf32>
    %c1_125 = arith.constant 1 : index
    %c4_126 = arith.constant 4 : index
    %c0_127 = arith.constant 0 : index
    %86 = vector.load %arg2[%c1_125, %c4_126, %c0_127] : memref<5x5x4xf32, #tpu.memory_space<vmem>>, vector<1x1x4xf32>
    %87 = vector.broadcast %86 : vector<1x1x4xf32> to vector<8x8x4xf32>
    %88 = arith.mulf %85, %87 : vector<8x8x4xf32>
    %89 = arith.addf %84, %88 : vector<8x8x4xf32>
    %c2_128 = arith.constant 2 : index
    %c0_129 = arith.constant 0 : index
    %c0_130 = arith.constant 0 : index
    %90 = vector.load %arg8[%c2_128, %c0_129, %c0_130] : memref<12x12x4xf32, #tpu.memory_space<vmem>>, vector<8x8x4xf32>
    %c2_131 = arith.constant 2 : index
    %c0_132 = arith.constant 0 : index
    %c0_133 = arith.constant 0 : index
    %91 = vector.load %arg2[%c2_131, %c0_132, %c0_133] : memref<5x5x4xf32, #tpu.memory_space<vmem>>, vector<1x1x4xf32>
    %92 = vector.broadcast %91 : vector<1x1x4xf32> to vector<8x8x4xf32>
    %93 = arith.mulf %90, %92 : vector<8x8x4xf32>
    %94 = arith.addf %89, %93 : vector<8x8x4xf32>
    %c2_134 = arith.constant 2 : index
    %c1_135 = arith.constant 1 : index
    %c0_136 = arith.constant 0 : index
    %95 = vector.load %arg8[%c2_134, %c1_135, %c0_136] : memref<12x12x4xf32, #tpu.memory_space<vmem>>, vector<8x8x4xf32>
    %c2_137 = arith.constant 2 : index
    %c1_138 = arith.constant 1 : index
    %c0_139 = arith.constant 0 : index
    %96 = vector.load %arg2[%c2_137, %c1_138, %c0_139] : memref<5x5x4xf32, #tpu.memory_space<vmem>>, vector<1x1x4xf32>
    %97 = vector.broadcast %96 : vector<1x1x4xf32> to vector<8x8x4xf32>
    %98 = arith.mulf %95, %97 : vector<8x8x4xf32>
    %99 = arith.addf %94, %98 : vector<8x8x4xf32>
    %c2_140 = arith.constant 2 : index
    %c2_141 = arith.constant 2 : index
    %c0_142 = arith.constant 0 : index
    %100 = vector.load %arg8[%c2_140, %c2_141, %c0_142] : memref<12x12x4xf32, #tpu.memory_space<vmem>>, vector<8x8x4xf32>
    %c2_143 = arith.constant 2 : index
    %c2_144 = arith.constant 2 : index
    %c0_145 = arith.constant 0 : index
    %101 = vector.load %arg2[%c2_143, %c2_144, %c0_145] : memref<5x5x4xf32, #tpu.memory_space<vmem>>, vector<1x1x4xf32>
    %102 = vector.broadcast %101 : vector<1x1x4xf32> to vector<8x8x4xf32>
    %103 = arith.mulf %100, %102 : vector<8x8x4xf32>
    %104 = arith.addf %99, %103 : vector<8x8x4xf32>
    %c2_146 = arith.constant 2 : index
    %c3_147 = arith.constant 3 : index
    %c0_148 = arith.constant 0 : index
    %105 = vector.load %arg8[%c2_146, %c3_147, %c0_148] : memref<12x12x4xf32, #tpu.memory_space<vmem>>, vector<8x8x4xf32>
    %c2_149 = arith.constant 2 : index
    %c3_150 = arith.constant 3 : index
    %c0_151 = arith.constant 0 : index
    %106 = vector.load %arg2[%c2_149, %c3_150, %c0_151] : memref<5x5x4xf32, #tpu.memory_space<vmem>>, vector<1x1x4xf32>
    %107 = vector.broadcast %106 : vector<1x1x4xf32> to vector<8x8x4xf32>
    %108 = arith.mulf %105, %107 : vector<8x8x4xf32>
    %109 = arith.addf %104, %108 : vector<8x8x4xf32>
    %c2_152 = arith.constant 2 : index
    %c4_153 = arith.constant 4 : index
    %c0_154 = arith.constant 0 : index
    %110 = vector.load %arg8[%c2_152, %c4_153, %c0_154] : memref<12x12x4xf32, #tpu.memory_space<vmem>>, vector<8x8x4xf32>
    %c2_155 = arith.constant 2 : index
    %c4_156 = arith.constant 4 : index
    %c0_157 = arith.constant 0 : index
    %111 = vector.load %arg2[%c2_155, %c4_156, %c0_157] : memref<5x5x4xf32, #tpu.memory_space<vmem>>, vector<1x1x4xf32>
    %112 = vector.broadcast %111 : vector<1x1x4xf32> to vector<8x8x4xf32>
    %113 = arith.mulf %110, %112 : vector<8x8x4xf32>
    %114 = arith.addf %109, %113 : vector<8x8x4xf32>
    %c3_158 = arith.constant 3 : index
    %c0_159 = arith.constant 0 : index
    %c0_160 = arith.constant 0 : index
    %115 = vector.load %arg8[%c3_158, %c0_159, %c0_160] : memref<12x12x4xf32, #tpu.memory_space<vmem>>, vector<8x8x4xf32>
    %c3_161 = arith.constant 3 : index
    %c0_162 = arith.constant 0 : index
    %c0_163 = arith.constant 0 : index
    %116 = vector.load %arg2[%c3_161, %c0_162, %c0_163] : memref<5x5x4xf32, #tpu.memory_space<vmem>>, vector<1x1x4xf32>
    %117 = vector.broadcast %116 : vector<1x1x4xf32> to vector<8x8x4xf32>
    %118 = arith.mulf %115, %117 : vector<8x8x4xf32>
    %119 = arith.addf %114, %118 : vector<8x8x4xf32>
    %c3_164 = arith.constant 3 : index
    %c1_165 = arith.constant 1 : index
    %c0_166 = arith.constant 0 : index
    %120 = vector.load %arg8[%c3_164, %c1_165, %c0_166] : memref<12x12x4xf32, #tpu.memory_space<vmem>>, vector<8x8x4xf32>
    %c3_167 = arith.constant 3 : index
    %c1_168 = arith.constant 1 : index
    %c0_169 = arith.constant 0 : index
    %121 = vector.load %arg2[%c3_167, %c1_168, %c0_169] : memref<5x5x4xf32, #tpu.memory_space<vmem>>, vector<1x1x4xf32>
    %122 = vector.broadcast %121 : vector<1x1x4xf32> to vector<8x8x4xf32>
    %123 = arith.mulf %120, %122 : vector<8x8x4xf32>
    %124 = arith.addf %119, %123 : vector<8x8x4xf32>
    %c3_170 = arith.constant 3 : index
    %c2_171 = arith.constant 2 : index
    %c0_172 = arith.constant 0 : index
    %125 = vector.load %arg8[%c3_170, %c2_171, %c0_172] : memref<12x12x4xf32, #tpu.memory_space<vmem>>, vector<8x8x4xf32>
    %c3_173 = arith.constant 3 : index
    %c2_174 = arith.constant 2 : index
    %c0_175 = arith.constant 0 : index
    %126 = vector.load %arg2[%c3_173, %c2_174, %c0_175] : memref<5x5x4xf32, #tpu.memory_space<vmem>>, vector<1x1x4xf32>
    %127 = vector.broadcast %126 : vector<1x1x4xf32> to vector<8x8x4xf32>
    %128 = arith.mulf %125, %127 : vector<8x8x4xf32>
    %129 = arith.addf %124, %128 : vector<8x8x4xf32>
    %c3_176 = arith.constant 3 : index
    %c3_177 = arith.constant 3 : index
    %c0_178 = arith.constant 0 : index
    %130 = vector.load %arg8[%c3_176, %c3_177, %c0_178] : memref<12x12x4xf32, #tpu.memory_space<vmem>>, vector<8x8x4xf32>
    %c3_179 = arith.constant 3 : index
    %c3_180 = arith.constant 3 : index
    %c0_181 = arith.constant 0 : index
    %131 = vector.load %arg2[%c3_179, %c3_180, %c0_181] : memref<5x5x4xf32, #tpu.memory_space<vmem>>, vector<1x1x4xf32>
    %132 = vector.broadcast %131 : vector<1x1x4xf32> to vector<8x8x4xf32>
    %133 = arith.mulf %130, %132 : vector<8x8x4xf32>
    %134 = arith.addf %129, %133 : vector<8x8x4xf32>
    %c3_182 = arith.constant 3 : index
    %c4_183 = arith.constant 4 : index
    %c0_184 = arith.constant 0 : index
    %135 = vector.load %arg8[%c3_182, %c4_183, %c0_184] : memref<12x12x4xf32, #tpu.memory_space<vmem>>, vector<8x8x4xf32>
    %c3_185 = arith.constant 3 : index
    %c4_186 = arith.constant 4 : index
    %c0_187 = arith.constant 0 : index
    %136 = vector.load %arg2[%c3_185, %c4_186, %c0_187] : memref<5x5x4xf32, #tpu.memory_space<vmem>>, vector<1x1x4xf32>
    %137 = vector.broadcast %136 : vector<1x1x4xf32> to vector<8x8x4xf32>
    %138 = arith.mulf %135, %137 : vector<8x8x4xf32>
    %139 = arith.addf %134, %138 : vector<8x8x4xf32>
    %c4_188 = arith.constant 4 : index
    %c0_189 = arith.constant 0 : index
    %c0_190 = arith.constant 0 : index
    %140 = vector.load %arg8[%c4_188, %c0_189, %c0_190] : memref<12x12x4xf32, #tpu.memory_space<vmem>>, vector<8x8x4xf32>
    %c4_191 = arith.constant 4 : index
    %c0_192 = arith.constant 0 : index
    %c0_193 = arith.constant 0 : index
    %141 = vector.load %arg2[%c4_191, %c0_192, %c0_193] : memref<5x5x4xf32, #tpu.memory_space<vmem>>, vector<1x1x4xf32>
    %142 = vector.broadcast %141 : vector<1x1x4xf32> to vector<8x8x4xf32>
    %143 = arith.mulf %140, %142 : vector<8x8x4xf32>
    %144 = arith.addf %139, %143 : vector<8x8x4xf32>
    %c4_194 = arith.constant 4 : index
    %c1_195 = arith.constant 1 : index
    %c0_196 = arith.constant 0 : index
    %145 = vector.load %arg8[%c4_194, %c1_195, %c0_196] : memref<12x12x4xf32, #tpu.memory_space<vmem>>, vector<8x8x4xf32>
    %c4_197 = arith.constant 4 : index
    %c1_198 = arith.constant 1 : index
    %c0_199 = arith.constant 0 : index
    %146 = vector.load %arg2[%c4_197, %c1_198, %c0_199] : memref<5x5x4xf32, #tpu.memory_space<vmem>>, vector<1x1x4xf32>
    %147 = vector.broadcast %146 : vector<1x1x4xf32> to vector<8x8x4xf32>
    %148 = arith.mulf %145, %147 : vector<8x8x4xf32>
    %149 = arith.addf %144, %148 : vector<8x8x4xf32>
    %c4_200 = arith.constant 4 : index
    %c2_201 = arith.constant 2 : index
    %c0_202 = arith.constant 0 : index
    %150 = vector.load %arg8[%c4_200, %c2_201, %c0_202] : memref<12x12x4xf32, #tpu.memory_space<vmem>>, vector<8x8x4xf32>
    %c4_203 = arith.constant 4 : index
    %c2_204 = arith.constant 2 : index
    %c0_205 = arith.constant 0 : index
    %151 = vector.load %arg2[%c4_203, %c2_204, %c0_205] : memref<5x5x4xf32, #tpu.memory_space<vmem>>, vector<1x1x4xf32>
    %152 = vector.broadcast %151 : vector<1x1x4xf32> to vector<8x8x4xf32>
    %153 = arith.mulf %150, %152 : vector<8x8x4xf32>
    %154 = arith.addf %149, %153 : vector<8x8x4xf32>
    %c4_206 = arith.constant 4 : index
    %c3_207 = arith.constant 3 : index
    %c0_208 = arith.constant 0 : index
    %155 = vector.load %arg8[%c4_206, %c3_207, %c0_208] : memref<12x12x4xf32, #tpu.memory_space<vmem>>, vector<8x8x4xf32>
    %c4_209 = arith.constant 4 : index
    %c3_210 = arith.constant 3 : index
    %c0_211 = arith.constant 0 : index
    %156 = vector.load %arg2[%c4_209, %c3_210, %c0_211] : memref<5x5x4xf32, #tpu.memory_space<vmem>>, vector<1x1x4xf32>
    %157 = vector.broadcast %156 : vector<1x1x4xf32> to vector<8x8x4xf32>
    %158 = arith.mulf %155, %157 : vector<8x8x4xf32>
    %159 = arith.addf %154, %158 : vector<8x8x4xf32>
    %c4_212 = arith.constant 4 : index
    %c4_213 = arith.constant 4 : index
    %c0_214 = arith.constant 0 : index
    %160 = vector.load %arg8[%c4_212, %c4_213, %c0_214] : memref<12x12x4xf32, #tpu.memory_space<vmem>>, vector<8x8x4xf32>
    %c4_215 = arith.constant 4 : index
    %c4_216 = arith.constant 4 : index
    %c0_217 = arith.constant 0 : index
    %161 = vector.load %arg2[%c4_215, %c4_216, %c0_217] : memref<5x5x4xf32, #tpu.memory_space<vmem>>, vector<1x1x4xf32>
    %162 = vector.broadcast %161 : vector<1x1x4xf32> to vector<8x8x4xf32>
    %163 = arith.mulf %160, %162 : vector<8x8x4xf32>
    %164 = arith.addf %159, %163 : vector<8x8x4xf32>
    %c2_218 = arith.constant 2 : index
    %c2_219 = arith.constant 2 : index
    %c0_220 = arith.constant 0 : index
    %165 = vector.load %arg8[%c2_218, %c2_219, %c0_220] : memref<12x12x4xf32, #tpu.memory_space<vmem>>, vector<8x8x4xf32>
    tpu.vector_store %arg8[%c2_218, %c2_219, %c0_220], %164 {strides = array<i32>} : memref<12x12x4xf32, #tpu.memory_space<vmem>>, vector<8x8x4xf32>,
    %c1_221 = arith.constant 1 : index
    %c1_222 = arith.constant 1 : index
    %c0_223 = arith.constant 0 : index
    %166 = vector.load %arg8[%c1_221, %c1_222, %c0_223] : memref<12x12x4xf32, #tpu.memory_space<vmem>>, vector<8x8x4xf32>
    %c1_224 = arith.constant 1 : index
    %c2_225 = arith.constant 2 : index
    %c0_226 = arith.constant 0 : index
    %167 = vector.load %arg8[%c1_224, %c2_225, %c0_226] : memref<12x12x4xf32, #tpu.memory_space<vmem>>, vector<8x8x4xf32>
    %c1_227 = arith.constant 1 : index
    %c3_228 = arith.constant 3 : index
    %c0_229 = arith.constant 0 : index
    %168 = vector.load %arg8[%c1_227, %c3_228, %c0_229] : memref<12x12x4xf32, #tpu.memory_space<vmem>>, vector<8x8x4xf32>
    %c2_230 = arith.constant 2 : index
    %c1_231 = arith.constant 1 : index
    %c0_232 = arith.constant 0 : index
    %169 = vector.load %arg8[%c2_230, %c1_231, %c0_232] : memref<12x12x4xf32, #tpu.memory_space<vmem>>, vector<8x8x4xf32>
    %c2_233 = arith.constant 2 : index
    %c2_234 = arith.constant 2 : index
    %c0_235 = arith.constant 0 : index
    %170 = vector.load %arg8[%c2_233, %c2_234, %c0_235] : memref<12x12x4xf32, #tpu.memory_space<vmem>>, vector<8x8x4xf32>
    %c2_236 = arith.constant 2 : index
    %c3_237 = arith.constant 3 : index
    %c0_238 = arith.constant 0 : index
    %171 = vector.load %arg8[%c2_236, %c3_237, %c0_238] : memref<12x12x4xf32, #tpu.memory_space<vmem>>, vector<8x8x4xf32>
    %c3_239 = arith.constant 3 : index
    %c1_240 = arith.constant 1 : index
    %c0_241 = arith.constant 0 : index
    %172 = vector.load %arg8[%c3_239, %c1_240, %c0_241] : memref<12x12x4xf32, #tpu.memory_space<vmem>>, vector<8x8x4xf32>
    %c3_242 = arith.constant 3 : index
    %c2_243 = arith.constant 2 : index
    %c0_244 = arith.constant 0 : index
    %173 = vector.load %arg8[%c3_242, %c2_243, %c0_244] : memref<12x12x4xf32, #tpu.memory_space<vmem>>, vector<8x8x4xf32>
    %c3_245 = arith.constant 3 : index
    %c3_246 = arith.constant 3 : index
    %c0_247 = arith.constant 0 : index
    %174 = vector.load %arg8[%c3_245, %c3_246, %c0_247] : memref<12x12x4xf32, #tpu.memory_space<vmem>>, vector<8x8x4xf32>
    %175 = tpu.concatenate %166, %167, %168, %169, %170, %171, %172, %173, %174 in 2 : vector<8x8x4xf32>, vector<8x8x4xf32>, vector<8x8x4xf32>, vector<8x8x4xf32>, vector<8x8x4xf32>, vector<8x8x4xf32>, vector<8x8x4xf32>, vector<8x8x4xf32>, vector<8x8x4xf32> -> vector<8x8x36xf32>
    %176 = vector.shape_cast %175 : vector<8x8x36xf32> to vector<64x36xf32>
    %177 = arith.truncf %176 : vector<64x36xf32> to vector<64x36xbf16>
    %c0_248 = arith.constant 0 : index
    %c0_249 = arith.constant 0 : index
    %178 = vector.load %arg5[%c0_248, %c0_249] : memref<36x12xbf16, #tpu.memory_space<vmem>>, vector<36x12xbf16>
    %cst_250 = arith.constant dense<0.000000e+00> : vector<64x12xf32>
    %179 = tpu.matmul %177, %178, %cst_250 {dimension_numbers = #tpu.dot_dimension_numbers<[1], [0], [0], [1], [0, 0, 1, 1], [], []>} : vector<64x36xbf16>, vector<36x12xbf16>, vector<64x12xf32> -> vector<64x12xf32>
    %c0_251 = arith.constant 0 : index
    %c0_252 = arith.constant 0 : index
    %180 = vector.load %arg6[%c0_251, %c0_252] : memref<1x12xf32, #tpu.memory_space<vmem>>, vector<1x12xf32>
    %181 = vector.broadcast %180 : vector<1x12xf32> to vector<64x12xf32>
    %182 = arith.addf %179, %181 : vector<64x12xf32>
    %183 = vector.extract_strided_slice %182 {offsets = [0, 0], sizes = [64, 4], strides = [1, 1]} : vector<64x12xf32> to vector<64x4xf32>
    %184 = vector.extract_strided_slice %182 {offsets = [0, 4], sizes = [64, 4], strides = [1, 1]} : vector<64x12xf32> to vector<64x4xf32>
    %185 = vector.extract_strided_slice %182 {offsets = [0, 8], sizes = [64, 4], strides = [1, 1]} : vector<64x12xf32> to vector<64x4xf32>
    %186 = arith.addf %37, %183 : vector<64x4xf32>
    %187 = arith.subf %37, %183 : vector<64x4xf32>
    %188 = arith.addf %186, %184 : vector<64x4xf32>
    %189 = arith.subf %186, %184 : vector<64x4xf32>
    %190 = arith.addf %187, %185 : vector<64x4xf32>
    %191 = arith.subf %187, %185 : vector<64x4xf32>
    %192 = tpu.concatenate %188, %189, %190, %191 in 1 : vector<64x4xf32>, vector<64x4xf32>, vector<64x4xf32>, vector<64x4xf32> -> vector<64x16xf32>
    %c0_253 = arith.constant 0 : index
    %c0_254 = arith.constant 0 : index
    %c0_255 = arith.constant 0 : index
    %193 = vector.load %arg7[%c0_253, %c0_254, %c0_255] : memref<1x64x16xf32, #tpu.memory_space<vmem>>, vector<1x64x16xf32>
    %194 = vector.shape_cast %193 : vector<1x64x16xf32> to vector<64x16xf32>
    %195 = vector.shape_cast %192 : vector<64x16xf32> to vector<1x64x16xf32>
    tpu.vector_store %arg7[%c0_253, %c0_254, %c0_255], %195 {strides = array<i32>} : memref<1x64x16xf32, #tpu.memory_space<vmem>>, vector<1x64x16xf32>,
    return
  }
  func.func @transform_0(%arg0: i32) -> (i32, i32, i32, i32, i32) {
    %c0_i32 = arith.constant 0 : i32
    %c0_i32_0 = arith.constant 0 : i32
    %c0_i32_1 = arith.constant 0 : i32
    %c0_i32_2 = arith.constant 0 : i32
    %c0_i32_3 = arith.constant 0 : i32
    return %arg0, %c0_i32, %c0_i32_0, %c0_i32_1, %c0_i32_2 : i32, i32, i32, i32, i32
  }
  func.func @transform_1(%arg0: i32) -> (i32, i32, i32) {
    %c0_i32 = arith.constant 0 : i32
    %c0_i32_0 = arith.constant 0 : i32
    %c0_i32_1 = arith.constant 0 : i32
    %c0_i32_2 = arith.constant 0 : i32
    return %c0_i32, %c0_i32_0, %c0_i32_1 : i32, i32, i32
  }
  func.func @transform_2(%arg0: i32) -> (i32, i32) {
    %c0_i32 = arith.constant 0 : i32
    %c0_i32_0 = arith.constant 0 : i32
    %c0_i32_1 = arith.constant 0 : i32
    return %c0_i32, %c0_i32_0 : i32, i32
  }
  func.func @transform_3(%arg0: i32) -> (i32, i32) {
    %c0_i32 = arith.constant 0 : i32
    %c0_i32_0 = arith.constant 0 : i32
    %c0_i32_1 = arith.constant 0 : i32
    return %c0_i32, %c0_i32_0 : i32, i32
  }
  func.func @transform_4(%arg0: i32) -> (i32, i32) {
    %c0_i32 = arith.constant 0 : i32
    %c0_i32_0 = arith.constant 0 : i32
    %c0_i32_1 = arith.constant 0 : i32
    return %c0_i32, %c0_i32_0 : i32, i32
  }
  func.func @transform_5(%arg0: i32) -> (i32, i32) {
    %c0_i32 = arith.constant 0 : i32
    %c0_i32_0 = arith.constant 0 : i32
    %c0_i32_1 = arith.constant 0 : i32
    return %c0_i32, %c0_i32_0 : i32, i32
  }
  func.func @transform_6(%arg0: i32) -> (i32, i32, i32) {
    %c0_i32 = arith.constant 0 : i32
    %c0_i32_0 = arith.constant 0 : i32
    %c0_i32_1 = arith.constant 0 : i32
    return %arg0, %c0_i32, %c0_i32_0 : i32, i32, i32
  }
}

</mosaic_0001>

<llo_original>
// kernel: tpu_custom_call.1
$region0: #{tpu_custom_call.1}
  #allocation0 [shape = 'u32[]', space=smem, size = 0x4, offset = 0x4, fixed_abs, tag = 'smem constant byte address 0x4 - core index']
  #allocation1 [shape = 'u32[72,128]{1,0:T(1,128)}', space=vmem, size = 0x9000, scoped, tag = 'internal scratch']
  #allocation2 [shape = 'f32[12,12,4]{2,1,0:T(8,128)}', space=vmem, size = 0x18000, scoped, tag = 'scratch operand']
  %s0 = inlined_call_operand.vmem [shape: f32[2,4,8,8,4], index: 0, kind: input, shape index: {}]
  %s1 = inlined_call_operand.vmem [shape: f32[5,5,4], index: 1, kind: input, shape index: {}]
  %s2 = inlined_call_operand.vmem [shape: bf16[36,4], index: 2, kind: input, shape index: {}]
  %s3 = inlined_call_operand.vmem [shape: f32[1,4], index: 3, kind: input, shape index: {}]
  %s4 = inlined_call_operand.vmem [shape: bf16[36,12], index: 4, kind: input, shape index: {}]
  %s5 = inlined_call_operand.vmem [shape: f32[1,12], index: 5, kind: input, shape index: {}]
  %s6 = inlined_call_operand.vmem [shape: f32[2,64,16], index: 6, kind: output, shape index: {}]
  %s7 = sld [smem:[#allocation0]]
  $region57: #{tpu_custom_call.1} parent=0
    _
  %s9 = ssub.s32 1, %s7
  %s10 = scalar_select 0, %s9, %s7
  loop: start=0, step=1, limit=4
  $region2: #{tpu_custom_call.1} parent=0 // loop_pre_header
    _
  $region3: #{tpu_custom_call.1} parent=0 // loop_header
    %s12 = sphi 0, %s16
    %p13 = scmp.ge.s32.totalorder %s12, 4
    %s22 = sphi 0, %s24
    %s25 = sphi 0, %s22
    %s26 = sphi 0, %s25
    %s42 = sphi 0, %s26
    %s46 = sphi 0, %s46
    %s48 = sphi 0, %s46
    %s49 = sphi 0, %s48
    %s63 = sphi 0, %s49
    %s67 = sphi 0, %s67
    %s69 = sphi 0, %s67
    %s70 = sphi 0, %s69
    %s84 = sphi 0, %s70
    %s88 = sphi 0, %s88
    %s90 = sphi 0, %s88
    %s91 = sphi 0, %s90
    %s105 = sphi 0, %s91
    %s109 = sphi 0, %s109
    %s111 = sphi 0, %s109
    %s112 = sphi 0, %s111
    %s126 = sphi 0, %s112
    %s130 = sphi 0, %s130
    %s132 = sphi 0, %s130
    %s133 = sphi 0, %s132
    %s147 = sphi 0, %s133
    %s153 = sphi 0, %s155
    %s156 = sphi 0, %s153
    %s157 = sphi 0, %s156
    %s173 = sphi 0, %s157
  $region4: #{tpu_custom_call.1} parent=0 // loop_header_branch
    %15 = sbr.rel (%p13) target = $region8
  $region5: #{tpu_custom_call.1} parent=0 // loop_body
    %s17 = ssub.s32 %s12, 1
    %s18 = ssub.s32 %s12, 2
    %s19 = sadd.s32 %s12, 1
    %s20 = ssub.s32 %s12, %s19
    %p21 = scmp.eq.s32.totalorder %s20, 0
    %s23 = sadd.s32 %s22, 1
    %s24 = scalar_select %p21, %s22, %s23
    %p27 = pneg %p21
    %p28 = scmp.eq.s32.totalorder %s12, 1
    %p29 = por %p27, %p28
    %p30 = scmp.ne.s32.totalorder %s22, %s25
    %p31 = scmp.eq.s32.totalorder %s12, 0
    %p32 = por %p30, %p31
    %p33 = scmp.ne.s32.totalorder %s22, %s25
    %p34 = scmp.eq.s32.totalorder %s17, 1
    %p35 = por %p33, %p34
    %p36 = scmp.ne.s32.totalorder %s25, %s26
    %p37 = scmp.eq.s32.totalorder %s17, 0
    %p38 = por %p36, %p37
    %p39 = scmp.ne.s32.totalorder %s25, %s26
    %p40 = scmp.eq.s32.totalorder %s18, 1
    %p41 = por %p39, %p40
    %p43 = scmp.ne.s32.totalorder %s26, %s42
    %p44 = scmp.eq.s32.totalorder %s18, 0
    %p45 = por %p43, %p44
    %s47 = sadd.s32 %s46, 1
    %p50 = scmp.eq.s32.totalorder %s12, 1
    %p51 = scmp.ne.s32.totalorder %s46, %s48
    %p52 = scmp.eq.s32.totalorder %s12, 0
    %p53 = por %p51, %p52
    %p54 = scmp.ne.s32.totalorder %s46, %s48
    %p55 = scmp.eq.s32.totalorder %s17, 1
    %p56 = por %p54, %p55
    %p57 = scmp.ne.s32.totalorder %s48, %s49
    %p58 = scmp.eq.s32.totalorder %s17, 0
    %p59 = por %p57, %p58
    %p60 = scmp.ne.s32.totalorder %s48, %s49
    %p61 = scmp.eq.s32.totalorder %s18, 1
    %p62 = por %p60, %p61
    %p64 = scmp.ne.s32.totalorder %s49, %s63
    %p65 = scmp.eq.s32.totalorder %s18, 0
    %p66 = por %p64, %p65
    %s68 = sadd.s32 %s67, 1
    %p71 = scmp.eq.s32.totalorder %s12, 1
    %p72 = scmp.ne.s32.totalorder %s67, %s69
    %p73 = scmp.eq.s32.totalorder %s12, 0
    %p74 = por %p72, %p73
    %p75 = scmp.ne.s32.totalorder %s67, %s69
    %p76 = scmp.eq.s32.totalorder %s17, 1
    %p77 = por %p75, %p76
    %p78 = scmp.ne.s32.totalorder %s69, %s70
    %p79 = scmp.eq.s32.totalorder %s17, 0
    %p80 = por %p78, %p79
    %p81 = scmp.ne.s32.totalorder %s69, %s70
    %p82 = scmp.eq.s32.totalorder %s18, 1
    %p83 = por %p81, %p82
    %p85 = scmp.ne.s32.totalorder %s70, %s84
    %p86 = scmp.eq.s32.totalorder %s18, 0
    %p87 = por %p85, %p86
    %s89 = sadd.s32 %s88, 1
    %p92 = scmp.eq.s32.totalorder %s12, 1
    %p93 = scmp.ne.s32.totalorder %s88, %s90
    %p94 = scmp.eq.s32.totalorder %s12, 0
    %p95 = por %p93, %p94
    %p96 = scmp.ne.s32.totalorder %s88, %s90
    %p97 = scmp.eq.s32.totalorder %s17, 1
    %p98 = por %p96, %p97
    %p99 = scmp.ne.s32.totalorder %s90, %s91
    %p100 = scmp.eq.s32.totalorder %s17, 0
    %p101 = por %p99, %p100
    %p102 = scmp.ne.s32.totalorder %s90, %s91
    %p103 = scmp.eq.s32.totalorder %s18, 1
    %p104 = por %p102, %p103
    %p106 = scmp.ne.s32.totalorder %s91, %s105
    %p107 = scmp.eq.s32.totalorder %s18, 0
    %p108 = por %p106, %p107
    %s110 = sadd.s32 %s109, 1
    %p113 = scmp.eq.s32.totalorder %s12, 1
    %p114 = scmp.ne.s32.totalorder %s109, %s111
    %p115 = scmp.eq.s32.totalorder %s12, 0
    %p116 = por %p114, %p115
    %p117 = scmp.ne.s32.totalorder %s109, %s111
    %p118 = scmp.eq.s32.totalorder %s17, 1
    %p119 = por %p117, %p118
    %p120 = scmp.ne.s32.totalorder %s111, %s112
    %p121 = scmp.eq.s32.totalorder %s17, 0
    %p122 = por %p120, %p121
    %p123 = scmp.ne.s32.totalorder %s111, %s112
    %p124 = scmp.eq.s32.totalorder %s18, 1
    %p125 = por %p123, %p124
    %p127 = scmp.ne.s32.totalorder %s112, %s126
    %p128 = scmp.eq.s32.totalorder %s18, 0
    %p129 = por %p127, %p128
    %s131 = sadd.s32 %s130, 1
    %p134 = scmp.eq.s32.totalorder %s12, 1
    %p135 = scmp.ne.s32.totalorder %s130, %s132
    %p136 = scmp.eq.s32.totalorder %s12, 0
    %p137 = por %p135, %p136
    %p138 = scmp.ne.s32.totalorder %s130, %s132
    %p139 = scmp.eq.s32.totalorder %s17, 1
    %p140 = por %p138, %p139
    %p141 = scmp.ne.s32.totalorder %s132, %s133
    %p142 = scmp.eq.s32.totalorder %s17, 0
    %p143 = por %p141, %p142
    %p144 = scmp.ne.s32.totalorder %s132, %s133
    %p145 = scmp.eq.s32.totalorder %s18, 1
    %p146 = por %p144, %p145
    %p148 = scmp.ne.s32.totalorder %s133, %s147
    %p149 = scmp.eq.s32.totalorder %s18, 0
    %p150 = por %p148, %p149
    %s151 = ssub.s32 %s12, %s19
    %p152 = scmp.eq.s32.totalorder %s151, 0
    %s154 = sadd.s32 %s153, 1
    %s155 = scalar_select %p152, %s153, %s154
    %p158 = pneg %p152
    %p159 = scmp.eq.s32.totalorder %s12, 1
    %p160 = por %p158, %p159
    %p161 = scmp.ne.s32.totalorder %s153, %s156
    %p162 = scmp.eq.s32.totalorder %s12, 0
    %p163 = por %p161, %p162
    %p164 = scmp.ne.s32.totalorder %s153, %s156
    %p165 = scmp.eq.s32.totalorder %s17, 1
    %p166 = por %p164, %p165
    %p167 = scmp.ne.s32.totalorder %s156, %s157
    %p168 = scmp.eq.s32.totalorder %s17, 0
    %p169 = por %p167, %p168
    %p170 = scmp.ne.s32.totalorder %s156, %s157
    %p171 = scmp.eq.s32.totalorder %s18, 1
    %p172 = por %p170, %p171
    %p174 = scmp.ne.s32.totalorder %s157, %s173
    %p175 = scmp.eq.s32.totalorder %s18, 0
    %p176 = por %p174, %p175
    %p177 = scmp.le.s32.totalorder 1, %s12
    %p178 = scmp.lt.s32.totalorder %s12, 3
    %p179 = pnand %p177, %p178
    %p180 = pneg %p179
    // Predicated region
    $region9: #{tpu_custom_call.1} parent=5 // pred_check
      _
    $region10: #{tpu_custom_call.1} parent=5 // pred_check_branch
      %182 = sbr.rel (%p179) target = $region12
    $region11: #{tpu_custom_call.1} parent=5 // pred_region
      %s183 = ssub.s32 %s12, 1
      // Predicated region
      $region13: #{tpu_custom_call.1} parent=11 // pred_check
        %p184 = pneg %p59
      $region14: #{tpu_custom_call.1} parent=11 // pred_check_branch
        %186 = sbr.rel (%p184) target = $region16
      $region15: #{tpu_custom_call.1} parent=11 // pred_region
        _
      $region16: #{tpu_custom_call.1} parent=11 // pred_fallthru
        _
      // Predicated region
      $region17: #{tpu_custom_call.1} parent=11 // pred_check
        %p187 = pneg %p80
      $region18: #{tpu_custom_call.1} parent=11 // pred_check_branch
        %189 = sbr.rel (%p187) target = $region20
      $region19: #{tpu_custom_call.1} parent=11 // pred_region
        _
      $region20: #{tpu_custom_call.1} parent=11 // pred_fallthru
        _
      // Predicated region
      $region21: #{tpu_custom_call.1} parent=11 // pred_check
        %p190 = pneg %p101
      $region22: #{tpu_custom_call.1} parent=11 // pred_check_branch
        %192 = sbr.rel (%p190) target = $region24
      $region23: #{tpu_custom_call.1} parent=11 // pred_region
        _
      $region24: #{tpu_custom_call.1} parent=11 // pred_fallthru
        _
      // Predicated region
      $region25: #{tpu_custom_call.1} parent=11 // pred_check
        %p193 = pneg %p122
      $region26: #{tpu_custom_call.1} parent=11 // pred_check_branch
        %195 = sbr.rel (%p193) target = $region28
      $region27: #{tpu_custom_call.1} parent=11 // pred_region
        _
      $region28: #{tpu_custom_call.1} parent=11 // pred_fallthru
        _
      // Predicated region
      $region29: #{tpu_custom_call.1} parent=11 // pred_check
        %p196 = pneg %p143
      $region30: #{tpu_custom_call.1} parent=11 // pred_check_branch
        %198 = sbr.rel (%p196) target = $region32
      $region31: #{tpu_custom_call.1} parent=11 // pred_region
        _
      $region32: #{tpu_custom_call.1} parent=11 // pred_fallthru
        _
    $region12: #{tpu_custom_call.1} parent=5 // pred_fallthru
      _
    %p199 = scmp.lt.s32.totalorder %s12, 2
    // Predicated region
    $region33: #{tpu_custom_call.1} parent=5 // pred_check
      %p200 = pneg %p199
    $region34: #{tpu_custom_call.1} parent=5 // pred_check_branch
      %202 = sbr.rel (%p200) target = $region36
    $region35: #{tpu_custom_call.1} parent=5 // pred_region
      // Predicated region
      $region37: #{tpu_custom_call.1} parent=35 // pred_check
        %p203 = pneg %p32
      $region38: #{tpu_custom_call.1} parent=35 // pred_check_branch
        %205 = sbr.rel (%p203) target = $region40
      $region39: #{tpu_custom_call.1} parent=35 // pred_region
        %p206 = scmp.lt.s32.totalorder %s12, 1
        %s207 = scalar_select %p206, %s12, 1
        %s208 = smul.addr %s207, 32
        %s209 = smul.addr %s208, 8
        %s210 = scalar_lea.vmem %s0, %s209
      $region40: #{tpu_custom_call.1} parent=35 // pred_fallthru
        _
    $region36: #{tpu_custom_call.1} parent=5 // pred_fallthru
      _
    %p211 = scmp.le.s32.totalorder 1, %s12
    %p212 = scmp.lt.s32.totalorder %s12, 3
    %p213 = pnand %p211, %p212
    %p214 = pneg %p213
    // Predicated region
    $region41: #{tpu_custom_call.1} parent=5 // pred_check
      _
    $region42: #{tpu_custom_call.1} parent=5 // pred_check_branch
      %216 = sbr.rel (%p213) target = $region44
    $region43: #{tpu_custom_call.1} parent=5 // pred_region
      %s217 = ssub.s32 %s12, 1
      %p218 = scmp.lt.s32.totalorder %s17, 1
      %s219 = scalar_select %p218, %s17, 1
      %s220 = smul.addr %s219, 32
      %s221 = smul.addr %s220, 8
      %s222 = scalar_lea.vmem %s0, %s221
      %p223 = pneg %p38
      %p224 = pneg %p35
      %p225 = pneg %p59
      %p226 = pneg %p56
      %p227 = pneg %p80
      %p228 = pneg %p77
      %p229 = pneg %p101
      %p230 = pneg %p98
      %p231 = pneg %p122
      %p232 = pneg %p119
      %p233 = pneg %p143
      %p234 = pneg %p140
      %p235 = pneg %p169
      %p236 = pneg %p166
      %p237 = scmp.lt.s32.totalorder %s17, 1
      %s238 = scalar_select %p237, %s17, 1
      %s239 = smul.addr %s238, 8
      %s240 = smul.addr %s239, 8
      %s241 = scalar_lea.vmem %s6, %s240
      %p242 = scmp.lt.s32.totalorder %s17, 1
      %s243 = scalar_select %p242, %s17, 1
      %s244 = smul.addr %s243, 32
      %s245 = smul.addr %s244, 8
      %s246 = scalar_lea.vmem %s0, %s245
      %p247 = scmp.lt.s32.totalorder %s17, 1
      %s248 = scalar_select %p247, %s17, 1
      %s249 = smul.addr %s248, 8
      %s250 = smul.addr %s249, 8
      %s251 = scalar_lea.vmem %s6, %s250
      %vm253 = vcmask 31744
      %254 = vst.msk [vmem:[#allocation2] sm:$0xff] %vm253, 0.0
      %vm255 = vcmask 27648
      %256 = vst.msk [vmem:[#allocation2 + $0x8] sm:$0xf] %vm255, 0.0
      %257 = vst.msk [vmem:[#allocation2 + $0x10] sm:$0xff] %vm253, 0.0
      %258 = vst.msk [vmem:[#allocation2 + $0x18] sm:$0xf] %vm255, 0.0
      %s259 = scalar_lea.vmem [#allocation2], 160
      %260 = vst.msk [vmem:[%s259] sm:$0xff] %vm253, 0.0
      %261 = vst.msk [vmem:[%s259 + $0x8] sm:$0xf] %vm255, 0.0
      %262 = vst.msk [vmem:[%s259 + $0x10] sm:$0xff] %vm253, 0.0
      %263 = vst.msk [vmem:[%s259 + $0x18] sm:$0xf] %vm255, 0.0
      %s264 = scalar_lea.vmem [#allocation2], 32
      %vm265 = vcmask 25600
      %266 = vst.msk [vmem:[%s264] sm:$0x3] %vm265, 0.0
      %267 = vst.msk [vmem:[%s264 + $0x10] sm:$0x3] %vm265, 0.0
      %268 = vst.msk [vmem:[%s264 + $0x20] sm:$0x3] %vm265, 0.0
      %269 = vst.msk [vmem:[%s264 + $0x30] sm:$0x3] %vm265, 0.0
      %270 = vst.msk [vmem:[%s264 + $0x40] sm:$0x3] %vm265, 0.0
      %271 = vst.msk [vmem:[%s264 + $0x50] sm:$0x3] %vm265, 0.0
      %272 = vst.msk [vmem:[%s264 + $0x60] sm:$0x3] %vm265, 0.0
      %273 = vst.msk [vmem:[%s264 + $0x70] sm:$0x3] %vm265, 0.0
      %274 = vst.msk [vmem:[%s264 + $0xa] sm:$0x3] %vm265, 0.0
      %275 = vst.msk [vmem:[%s264 + $0x1a] sm:$0x3] %vm265, 0.0
      %276 = vst.msk [vmem:[%s264 + $0x2a] sm:$0x3] %vm265, 0.0
      %277 = vst.msk [vmem:[%s264 + $0x3a] sm:$0x3] %vm265, 0.0
      %278 = vst.msk [vmem:[%s264 + $0x4a] sm:$0x3] %vm265, 0.0
      %279 = vst.msk [vmem:[%s264 + $0x5a] sm:$0x3] %vm265, 0.0
      %280 = vst.msk [vmem:[%s264 + $0x6a] sm:$0x3] %vm265, 0.0
      %281 = vst.msk [vmem:[%s264 + $0x7a] sm:$0x3] %vm265, 0.0
      %v282 = vld [vmem:[%s246] sm:$0xff]
      %v283 = vld [vmem:[%s246 + $0x8] sm:$0xff]
      %v284 = vld [vmem:[%s246 + $0x10] sm:$0xff]
      %v285 = vld [vmem:[%s246 + $0x18] sm:$0xff]
      %v286 = vld [vmem:[%s246 + $0x20] sm:$0xff]
      %v287 = vld [vmem:[%s246 + $0x28] sm:$0xff]
      %v288 = vld [vmem:[%s246 + $0x30] sm:$0xff]
      %v289 = vld [vmem:[%s246 + $0x38] sm:$0xff]
      %s290 = scalar_lea.vmem %s246, 64
      %v291 = vld [vmem:[%s290] sm:$0xff]
      %v292 = vld [vmem:[%s290 + $0x8] sm:$0xff]
      %v293 = vld [vmem:[%s290 + $0x10] sm:$0xff]
      %v294 = vld [vmem:[%s290 + $0x18] sm:$0xff]
      %v295 = vld [vmem:[%s290 + $0x20] sm:$0xff]
      %v296 = vld [vmem:[%s290 + $0x28] sm:$0xff]
      %v297 = vld [vmem:[%s290 + $0x30] sm:$0xff]
      %v298 = vld [vmem:[%s290 + $0x38] sm:$0xff]
      %s299 = scalar_lea.vmem %s246, 128
      %v300 = vld [vmem:[%s299] sm:$0xff]
      %v301 = vld [vmem:[%s299 + $0x8] sm:$0xff]
      %v302 = vld [vmem:[%s299 + $0x10] sm:$0xff]
      %v303 = vld [vmem:[%s299 + $0x18] sm:$0xff]
      %v304 = vld [vmem:[%s299 + $0x20] sm:$0xff]
      %v305 = vld [vmem:[%s299 + $0x28] sm:$0xff]
      %v306 = vld [vmem:[%s299 + $0x30] sm:$0xff]
      %v307 = vld [vmem:[%s299 + $0x38] sm:$0xff]
      %s308 = scalar_lea.vmem %s246, 192
      %v309 = vld [vmem:[%s308] sm:$0xff]
      %v310 = vld [vmem:[%s308 + $0x8] sm:$0xff]
      %v311 = vld [vmem:[%s308 + $0x10] sm:$0xff]
      %v312 = vld [vmem:[%s308 + $0x18] sm:$0xff]
      %v313 = vld [vmem:[%s308 + $0x20] sm:$0xff]
      %v314 = vld [vmem:[%s308 + $0x28] sm:$0xff]
      %v315 = vld [vmem:[%s308 + $0x30] sm:$0xff]
      %v316 = vld [vmem:[%s308 + $0x38] sm:$0xff]
      %v317 = vadd.f32 %v282, %v291
      %v318 = vadd.f32 %v283, %v292
      %v319 = vadd.f32 %v284, %v293
      %v320 = vadd.f32 %v285, %v294
      %v321 = vadd.f32 %v286, %v295
      %v322 = vadd.f32 %v287, %v296
      %v323 = vadd.f32 %v288, %v297
      %v324 = vadd.f32 %v289, %v298
      %v325 = vadd.f32 %v300, %v309
      %v326 = vadd.f32 %v301, %v310
      %v327 = vadd.f32 %v302, %v311
      %v328 = vadd.f32 %v303, %v312
      %v329 = vadd.f32 %v304, %v313
      %v330 = vadd.f32 %v305, %v314
      %v331 = vadd.f32 %v306, %v315
      %v332 = vadd.f32 %v307, %v316
      %v333 = vadd.f32 %v317, %v325
      %v334 = vadd.f32 %v318, %v326
      %v335 = vadd.f32 %v319, %v327
      %v336 = vadd.f32 %v320, %v328
      %v337 = vadd.f32 %v321, %v329
      %v338 = vadd.f32 %v322, %v330
      %v339 = vadd.f32 %v323, %v331
      %v340 = vadd.f32 %v324, %v332
      %v341 = vsub.f32 %v317, %v325
      %v342 = vsub.f32 %v318, %v326
      %v343 = vsub.f32 %v319, %v327
      %v344 = vsub.f32 %v320, %v328
      %v345 = vsub.f32 %v321, %v329
      %v346 = vsub.f32 %v322, %v330
      %v347 = vsub.f32 %v323, %v331
      %v348 = vsub.f32 %v324, %v332
      %349 = vst.msk [vmem:[%s264 + $0x2] sm:$0xff] %vm253, %v333
      %350 = vst.msk [vmem:[%s264 + $0x12] sm:$0xff] %vm253, %v334
      %351 = vst.msk [vmem:[%s264 + $0x22] sm:$0xff] %vm253, %v335
      %352 = vst.msk [vmem:[%s264 + $0x32] sm:$0xff] %vm253, %v336
      %353 = vst.msk [vmem:[%s264 + $0x42] sm:$0xff] %vm253, %v337
      %354 = vst.msk [vmem:[%s264 + $0x52] sm:$0xff] %vm253, %v338
      %355 = vst.msk [vmem:[%s264 + $0x62] sm:$0xff] %vm253, %v339
      %356 = vst.msk [vmem:[%s264 + $0x72] sm:$0xff] %vm253, %v340
      %s357 = scalar_lea.vmem [#allocation2], 16
      %v358 = vld [vmem:[%s357 + $0x1] sm:$0xff]
      %v359 = vld [vmem:[%s357 + $0x11] sm:$0xff]
      %v360 = vld [vmem:[%s357 + $0x21] sm:$0xff]
      %v361 = vld [vmem:[%s357 + $0x31] sm:$0xff]
      %v362 = vld [vmem:[%s357 + $0x41] sm:$0xff]
      %v363 = vld [vmem:[%s357 + $0x51] sm:$0xff]
      %v364 = vld [vmem:[%s357 + $0x61] sm:$0xff]
      %v365 = vld [vmem:[%s357 + $0x71] sm:$0xff]
      %v366 = vld [vmem:[%s357 + $0x2] sm:$0xff]
      %v367 = vld [vmem:[%s357 + $0x12] sm:$0xff]
      %v368 = vld [vmem:[%s357 + $0x22] sm:$0xff]
      %v369 = vld [vmem:[%s357 + $0x32] sm:$0xff]
      %v370 = vld [vmem:[%s357 + $0x42] sm:$0xff]
      %v371 = vld [vmem:[%s357 + $0x52] sm:$0xff]
      %v372 = vld [vmem:[%s357 + $0x62] sm:$0xff]
      %v373 = vld [vmem:[%s357 + $0x72] sm:$0xff]
      %v374 = vld [vmem:[%s357 + $0x3] sm:$0xff]
      %v375 = vld [vmem:[%s357 + $0x13] sm:$0xff]
      %v376 = vld [vmem:[%s357 + $0x23] sm:$0xff]
      %v377 = vld [vmem:[%s357 + $0x33] sm:$0xff]
      %v378 = vld [vmem:[%s357 + $0x43] sm:$0xff]
      %v379 = vld [vmem:[%s357 + $0x53] sm:$0xff]
      %v380 = vld [vmem:[%s357 + $0x63] sm:$0xff]
      %v381 = vld [vmem:[%s357 + $0x73] sm:$0xff]
      %v382 = vld [vmem:[%s264 + $0x1] sm:$0xff]
      %v383 = vld [vmem:[%s264 + $0x11] sm:$0xff]
      %v384 = vld [vmem:[%s264 + $0x21] sm:$0xff]
      %v385 = vld [vmem:[%s264 + $0x31] sm:$0xff]
      %v386 = vld [vmem:[%s264 + $0x41] sm:$0xff]
      %v387 = vld [vmem:[%s264 + $0x51] sm:$0xff]
      %v388 = vld [vmem:[%s264 + $0x61] sm:$0xff]
      %v389 = vld [vmem:[%s264 + $0x71] sm:$0xff]
      %v390 = vld [vmem:[%s264 + $0x2] sm:$0xff]
      %v391 = vld [vmem:[%s264 + $0x12] sm:$0xff]
      %v392 = vld [vmem:[%s264 + $0x22] sm:$0xff]
      %v393 = vld [vmem:[%s264 + $0x32] sm:$0xff]
      %v394 = vld [vmem:[%s264 + $0x42] sm:$0xff]
      %v395 = vld [vmem:[%s264 + $0x52] sm:$0xff]
      %v396 = vld [vmem:[%s264 + $0x62] sm:$0xff]
      %v397 = vld [vmem:[%s264 + $0x72] sm:$0xff]
      %v398 = vld [vmem:[%s264 + $0x3] sm:$0xff]
      %v399 = vld [vmem:[%s264 + $0x13] sm:$0xff]
      %v400 = vld [vmem:[%s264 + $0x23] sm:$0xff]
      %v401 = vld [vmem:[%s264 + $0x33] sm:$0xff]
      %v402 = vld [vmem:[%s264 + $0x43] sm:$0xff]
      %v403 = vld [vmem:[%s264 + $0x53] sm:$0xff]
      %v404 = vld [vmem:[%s264 + $0x63] sm:$0xff]
      %v405 = vld [vmem:[%s264 + $0x73] sm:$0xff]
      %s406 = scalar_lea.vmem [#allocation2], 48
      %v407 = vld [vmem:[%s406 + $0x1] sm:$0xff]
      %v408 = vld [vmem:[%s406 + $0x11] sm:$0xff]
      %v409 = vld [vmem:[%s406 + $0x21] sm:$0xff]
      %v410 = vld [vmem:[%s406 + $0x31] sm:$0xff]
      %v411 = vld [vmem:[%s406 + $0x41] sm:$0xff]
      %v412 = vld [vmem:[%s406 + $0x51] sm:$0xff]
      %v413 = vld [vmem:[%s406 + $0x61] sm:$0xff]
      %v414 = vld [vmem:[%s406 + $0x71] sm:$0xff]
      %v415 = vld [vmem:[%s406 + $0x2] sm:$0xff]
      %v416 = vld [vmem:[%s406 + $0x12] sm:$0xff]
      %v417 = vld [vmem:[%s406 + $0x22] sm:$0xff]
      %v418 = vld [vmem:[%s406 + $0x32] sm:$0xff]
      %v419 = vld [vmem:[%s406 + $0x42] sm:$0xff]
      %v420 = vld [vmem:[%s406 + $0x52] sm:$0xff]
      %v421 = vld [vmem:[%s406 + $0x62] sm:$0xff]
      %v422 = vld [vmem:[%s406 + $0x72] sm:$0xff]
      %v423 = vld [vmem:[%s406 + $0x3] sm:$0xff]
      %v424 = vld [vmem:[%s406 + $0x13] sm:$0xff]
      %v425 = vld [vmem:[%s406 + $0x23] sm:$0xff]
      %v426 = vld [vmem:[%s406 + $0x33] sm:$0xff]
      %v427 = vld [vmem:[%s406 + $0x43] sm:$0xff]
      %v428 = vld [vmem:[%s406 + $0x53] sm:$0xff]
      %v429 = vld [vmem:[%s406 + $0x63] sm:$0xff]
      %v430 = vld [vmem:[%s406 + $0x73] sm:$0xff]
      %439 = vrot.lane.b32.xlu0 %v366, 4
      %v440 = vpop.permute.xlu0 %439
      %441 = vrot.lane.b32.xlu0 %v367, 4
      %v442 = vpop.permute.xlu0 %441
      %443 = vrot.lane.b32.xlu0 %v368, 4
      %v444 = vpop.permute.xlu0 %443
      %445 = vrot.lane.b32.xlu0 %v369, 4
      %v446 = vpop.permute.xlu0 %445
      %447 = vrot.lane.b32.xlu0 %v370, 4
      %v448 = vpop.permute.xlu0 %447
      %449 = vrot.lane.b32.xlu0 %v371, 4
      %v450 = vpop.permute.xlu0 %449
      %451 = vrot.lane.b32.xlu0 %v372, 4
      %v452 = vpop.permute.xlu0 %451
      %453 = vrot.lane.b32.xlu0 %v373, 4
      %v454 = vpop.permute.xlu0 %453
      %471 = vrot.lane.b32.xlu0 %v374, 8
      %v472 = vpop.permute.xlu0 %471
      %473 = vrot.lane.b32.xlu0 %v375, 8
      %v474 = vpop.permute.xlu0 %473
      %475 = vrot.lane.b32.xlu0 %v376, 8
      %v476 = vpop.permute.xlu0 %475
      %477 = vrot.lane.b32.xlu0 %v377, 8
      %v478 = vpop.permute.xlu0 %477
      %479 = vrot.lane.b32.xlu0 %v378, 8
      %v480 = vpop.permute.xlu0 %479
      %481 = vrot.lane.b32.xlu0 %v379, 8
      %v482 = vpop.permute.xlu0 %481
      %483 = vrot.lane.b32.xlu0 %v380, 8
      %v484 = vpop.permute.xlu0 %483
      %485 = vrot.lane.b32.xlu0 %v381, 8
      %v486 = vpop.permute.xlu0 %485
      %503 = vrot.lane.b32.xlu0 %v382, 12
      %v504 = vpop.permute.xlu0 %503
      %505 = vrot.lane.b32.xlu0 %v383, 12
      %v506 = vpop.permute.xlu0 %505
      %507 = vrot.lane.b32.xlu0 %v384, 12
      %v508 = vpop.permute.xlu0 %507
      %509 = vrot.lane.b32.xlu0 %v385, 12
      %v510 = vpop.permute.xlu0 %509
      %511 = vrot.lane.b32.xlu0 %v386, 12
      %v512 = vpop.permute.xlu0 %511
      %513 = vrot.lane.b32.xlu0 %v387, 12
      %v514 = vpop.permute.xlu0 %513
      %515 = vrot.lane.b32.xlu0 %v388, 12
      %v516 = vpop.permute.xlu0 %515
      %517 = vrot.lane.b32.xlu0 %v389, 12
      %v518 = vpop.permute.xlu0 %517
      %535 = vrot.lane.b32.xlu0 %v390, 16
      %v536 = vpop.permute.xlu0 %535
      %537 = vrot.lane.b32.xlu0 %v391, 16
      %v538 = vpop.permute.xlu0 %537
      %539 = vrot.lane.b32.xlu0 %v392, 16
      %v540 = vpop.permute.xlu0 %539
      %541 = vrot.lane.b32.xlu0 %v393, 16
      %v542 = vpop.permute.xlu0 %541
      %543 = vrot.lane.b32.xlu0 %v394, 16
      %v544 = vpop.permute.xlu0 %543
      %545 = vrot.lane.b32.xlu0 %v395, 16
      %v546 = vpop.permute.xlu0 %545
      %547 = vrot.lane.b32.xlu0 %v396, 16
      %v548 = vpop.permute.xlu0 %547
      %549 = vrot.lane.b32.xlu0 %v397, 16
      %v550 = vpop.permute.xlu0 %549
      %567 = vrot.lane.b32.xlu0 %v398, 20
      %v568 = vpop.permute.xlu0 %567
      %569 = vrot.lane.b32.xlu0 %v399, 20
      %v570 = vpop.permute.xlu0 %569
      %571 = vrot.lane.b32.xlu0 %v400, 20
      %v572 = vpop.permute.xlu0 %571
      %573 = vrot.lane.b32.xlu0 %v401, 20
      %v574 = vpop.permute.xlu0 %573
      %575 = vrot.lane.b32.xlu0 %v402, 20
      %v576 = vpop.permute.xlu0 %575
      %577 = vrot.lane.b32.xlu0 %v403, 20
      %v578 = vpop.permute.xlu0 %577
      %579 = vrot.lane.b32.xlu0 %v404, 20
      %v580 = vpop.permute.xlu0 %579
      %581 = vrot.lane.b32.xlu0 %v405, 20
      %v582 = vpop.permute.xlu0 %581
      %599 = vrot.lane.b32.xlu0 %v407, 24
      %v600 = vpop.permute.xlu0 %599
      %601 = vrot.lane.b32.xlu0 %v408, 24
      %v602 = vpop.permute.xlu0 %601
      %603 = vrot.lane.b32.xlu0 %v409, 24
      %v604 = vpop.permute.xlu0 %603
      %605 = vrot.lane.b32.xlu0 %v410, 24
      %v606 = vpop.permute.xlu0 %605
      %607 = vrot.lane.b32.xlu0 %v411, 24
      %v608 = vpop.permute.xlu0 %607
      %609 = vrot.lane.b32.xlu0 %v412, 24
      %v610 = vpop.permute.xlu0 %609
      %611 = vrot.lane.b32.xlu0 %v413, 24
      %v612 = vpop.permute.xlu0 %611
      %613 = vrot.lane.b32.xlu0 %v414, 24
      %v614 = vpop.permute.xlu0 %613
      %631 = vrot.lane.b32.xlu0 %v415, 28
      %v632 = vpop.permute.xlu0 %631
      %633 = vrot.lane.b32.xlu0 %v416, 28
      %v634 = vpop.permute.xlu0 %633
      %635 = vrot.lane.b32.xlu0 %v417, 28
      %v636 = vpop.permute.xlu0 %635
      %637 = vrot.lane.b32.xlu0 %v418, 28
      %v638 = vpop.permute.xlu0 %637
      %639 = vrot.lane.b32.xlu0 %v419, 28
      %v640 = vpop.permute.xlu0 %639
      %641 = vrot.lane.b32.xlu0 %v420, 28
      %v642 = vpop.permute.xlu0 %641
      %643 = vrot.lane.b32.xlu0 %v421, 28
      %v644 = vpop.permute.xlu0 %643
      %645 = vrot.lane.b32.xlu0 %v422, 28
      %v646 = vpop.permute.xlu0 %645
      %663 = vrot.lane.b32.xlu0 %v423, 32
      %v664 = vpop.permute.xlu0 %663
      %665 = vrot.lane.b32.xlu0 %v424, 32
      %v666 = vpop.permute.xlu0 %665
      %667 = vrot.lane.b32.xlu0 %v425, 32
      %v668 = vpop.permute.xlu0 %667
      %669 = vrot.lane.b32.xlu0 %v426, 32
      %v670 = vpop.permute.xlu0 %669
      %671 = vrot.lane.b32.xlu0 %v427, 32
      %v672 = vpop.permute.xlu0 %671
      %673 = vrot.lane.b32.xlu0 %v428, 32
      %v674 = vpop.permute.xlu0 %673
      %675 = vrot.lane.b32.xlu0 %v429, 32
      %v676 = vpop.permute.xlu0 %675
      %677 = vrot.lane.b32.xlu0 %v430, 32
      %v678 = vpop.permute.xlu0 %677
      %v687 = vsel %vm253, %v358, %v440
      %v688 = vsel %vm253, %v359, %v442
      %v689 = vsel %vm253, %v360, %v444
      %v690 = vsel %vm253, %v361, %v446
      %v691 = vsel %vm253, %v362, %v448
      %v692 = vsel %vm253, %v363, %v450
      %v693 = vsel %vm253, %v364, %v452
      %v694 = vsel %vm253, %v365, %v454
      %vm695 = vcmask 64512
      %v696 = vsel %vm695, %v687, %v472
      %v697 = vsel %vm695, %v688, %v474
      %v698 = vsel %vm695, %v689, %v476
      %v699 = vsel %vm695, %v690, %v478
      %v700 = vsel %vm695, %v691, %v480
      %v701 = vsel %vm695, %v692, %v482
      %v702 = vsel %vm695, %v693, %v484
      %v703 = vsel %vm695, %v694, %v486
      %vm704 = vcmask 97280
      %v705 = vsel %vm704, %v696, %v504
      %v706 = vsel %vm704, %v697, %v506
      %v707 = vsel %vm704, %v698, %v508
      %v708 = vsel %vm704, %v699, %v510
      %v709 = vsel %vm704, %v700, %v512
      %v710 = vsel %vm704, %v701, %v514
      %v711 = vsel %vm704, %v702, %v516
      %v712 = vsel %vm704, %v703, %v518
      %vm713 = vcmask 130048
      %v714 = vsel %vm713, %v705, %v536
      %v715 = vsel %vm713, %v706, %v538
      %v716 = vsel %vm713, %v707, %v540
      %v717 = vsel %vm713, %v708, %v542
      %v718 = vsel %vm713, %v709, %v544
      %v719 = vsel %vm713, %v710, %v546
      %v720 = vsel %vm713, %v711, %v548
      %v721 = vsel %vm713, %v712, %v550
      %vm722 = vcmask 162816
      %v723 = vsel %vm722, %v714, %v568
      %v724 = vsel %vm722, %v715, %v570
      %v725 = vsel %vm722, %v716, %v572
      %v726 = vsel %vm722, %v717, %v574
      %v727 = vsel %vm722, %v718, %v576
      %v728 = vsel %vm722, %v719, %v578
      %v729 = vsel %vm722, %v720, %v580
      %v730 = vsel %vm722, %v721, %v582
      %vm731 = vcmask 195584
      %v732 = vsel %vm731, %v723, %v600
      %v733 = vsel %vm731, %v724, %v602
      %v734 = vsel %vm731, %v725, %v604
      %v735 = vsel %vm731, %v726, %v606
      %v736 = vsel %vm731, %v727, %v608
      %v737 = vsel %vm731, %v728, %v610
      %v738 = vsel %vm731, %v729, %v612
      %v739 = vsel %vm731, %v730, %v614
      %vm740 = vcmask 228352
      %v741 = vsel %vm740, %v732, %v632
      %v742 = vsel %vm740, %v733, %v634
      %v743 = vsel %vm740, %v734, %v636
      %v744 = vsel %vm740, %v735, %v638
      %v745 = vsel %vm740, %v736, %v640
      %v746 = vsel %vm740, %v737, %v642
      %v747 = vsel %vm740, %v738, %v644
      %v748 = vsel %vm740, %v739, %v646
      %vm749 = vcmask 261120
      %v750 = vsel %vm749, %v741, %v664
      %v751 = vsel %vm749, %v742, %v666
      %v752 = vsel %vm749, %v743, %v668
      %v753 = vsel %vm749, %v744, %v670
      %v754 = vsel %vm749, %v745, %v672
      %v755 = vsel %vm749, %v746, %v674
      %v756 = vsel %vm749, %v747, %v676
      %v757 = vsel %vm749, %v748, %v678
      %v758 = vpack.c.bf16 %v751, %v750
      %v759 = vpack.c.bf16 %v753, %v752
      %v760 = vpack.c.bf16 %v755, %v754
      %v761 = vpack.c.bf16 %v757, %v756
      %v762 = vld [vmem:[%s2] sm:$0xf]
      %v763 = vld [vmem:[%s2 + $0x4] sm:$0xf]
      %v764 = vld [vmem:[%s2 + $0x8] sm:$0xf]
      %v765 = vld [vmem:[%s2 + $0xc] sm:$0xf]
      %v766 = vld [vmem:[%s2 + $0x10] sm:$0x3]
      %v767 = vld [vmem:[%s3] sm:$0x1]
      %v769 = vperm.slane %v767, 0
      %v776 = vunpack.c.l.b16 %v762
      %v777 = vunpack.c.l.b16 %v763
      %v778 = vunpack.c.l.b16 %v764
      %v779 = vunpack.c.l.b16 %v765
      %v780 = vunpack.c.l.b16 %v766
      %v781 = vpack.c.b16 %v777, %v776
      %v782 = vpack.c.b16 %v779, %v778
      %v783 = vpack.c.b16 %v780, %v780
      %vm786 = vcmask 293888
      %v788 = vsel %vm786, %v758, 0
      %v791 = vsel %vm786, %v759, 0
      %v794 = vsel %vm786, %v760, 0
      %v797 = vsel %vm786, %v761, 0
      %vm799 = vcmask 1041408
      %v801 = vsel %vm799, %v783, 0
      %803 = vmatpush.bf16.msra.mxu0 0
      %804 = vmatpush.bf16.msra.mxu0 0
      %805 = vmatpush.bf16.msra.mxu0 0
      %806 = vmatpush.bf16.msra.mxu0 0
      %807 = vmatpush.bf16.msra.mxu0 0
      %808 = vmatpush.bf16.msra.mxu0 %v801
      %809 = vmatpush.bf16.msra.mxu0 %v782
      %810 = vmatpush.bf16.msra.mxu0 %v781
      %811 = vmatmul.bf16.gmra.mxu0 %v788
      %v812 = vpop.f32.mrf.mxu0
      %v813 = vadd.f32 %v769, %v812
      %v814 = vpop.f32.mrf.mxu0
      %v815 = vadd.f32 %v769, %v814
      %816 = vmatmul.bf16.gmra.mxu0 %v791
      %v817 = vpop.f32.mrf.mxu0
      %v818 = vadd.f32 %v769, %v817
      %v819 = vpop.f32.mrf.mxu0
      %v820 = vadd.f32 %v769, %v819
      %821 = vmatmul.bf16.gmra.mxu0 %v794
      %v822 = vpop.f32.mrf.mxu0
      %v823 = vadd.f32 %v769, %v822
      %v824 = vpop.f32.mrf.mxu0
      %v825 = vadd.f32 %v769, %v824
      %826 = vmatmul.bf16.gmra.mxu0 %v797
      %v827 = vpop.f32.mrf.mxu0
      %v828 = vadd.f32 %v769, %v827
      %v829 = vpop.f32.mrf.mxu0
      %v830 = vadd.f32 %v769, %v829
      %831 = vdwg.mxu0
      %832 = vst.msk [vmem:[%s264 + $0x2] sm:$0xff] %vm253, %v341
      %833 = vst.msk [vmem:[%s264 + $0x12] sm:$0xff] %vm253, %v342
      %834 = vst.msk [vmem:[%s264 + $0x22] sm:$0xff] %vm253, %v343
      %835 = vst.msk [vmem:[%s264 + $0x32] sm:$0xff] %vm253, %v344
      %836 = vst.msk [vmem:[%s264 + $0x42] sm:$0xff] %vm253, %v345
      %837 = vst.msk [vmem:[%s264 + $0x52] sm:$0xff] %vm253, %v346
      %838 = vst.msk [vmem:[%s264 + $0x62] sm:$0xff] %vm253, %v347
      %839 = vst.msk [vmem:[%s264 + $0x72] sm:$0xff] %vm253, %v348
      %v840 = vld [vmem:[#allocation2] sm:$0xff]
      %v841 = vld [vmem:[#allocation2 + $0x10] sm:$0xff]
      %v842 = vld [vmem:[#allocation2 + $0x20] sm:$0xff]
      %v843 = vld [vmem:[#allocation2 + $0x30] sm:$0xff]
      %v844 = vld [vmem:[#allocation2 + $0x40] sm:$0xff]
      %v845 = vld [vmem:[#allocation2 + $0x50] sm:$0xff]
      %v846 = vld [vmem:[#allocation2 + $0x60] sm:$0xff]
      %v847 = vld [vmem:[#allocation2 + $0x70] sm:$0xff]
      %v848 = vld [vmem:[%s1] sm:$0x1]
      %v849 = vperm.slane %v848, 0
      %v850 = vmul.f32 %v840, %v849
      %v851 = vmul.f32 %v841, %v849
      %v852 = vmul.f32 %v842, %v849
      %v853 = vmul.f32 %v843, %v849
      %v854 = vmul.f32 %v844, %v849
      %v855 = vmul.f32 %v845, %v849
      %v856 = vmul.f32 %v846, %v849
      %v857 = vmul.f32 %v847, %v849
      %v858 = vadd.f32 %v850, 0.0
      %v859 = vadd.f32 %v851, 0.0
      %v860 = vadd.f32 %v852, 0.0
      %v861 = vadd.f32 %v853, 0.0
      %v862 = vadd.f32 %v854, 0.0
      %v863 = vadd.f32 %v855, 0.0
      %v864 = vadd.f32 %v856, 0.0
      %v865 = vadd.f32 %v857, 0.0
      %v866 = vld [vmem:[#allocation2 + $0x1] sm:$0xff]
      %v867 = vld [vmem:[#allocation2 + $0x11] sm:$0xff]
      %v868 = vld [vmem:[#allocation2 + $0x21] sm:$0xff]
      %v869 = vld [vmem:[#allocation2 + $0x31] sm:$0xff]
      %v870 = vld [vmem:[#allocation2 + $0x41] sm:$0xff]
      %v871 = vld [vmem:[#allocation2 + $0x51] sm:$0xff]
      %v872 = vld [vmem:[#allocation2 + $0x61] sm:$0xff]
      %v873 = vld [vmem:[#allocation2 + $0x71] sm:$0xff]
      %v874 = vld [vmem:[%s1 + $0x1] sm:$0x1]
      %v875 = vperm.slane %v874, 0
      %v876 = vmul.f32 %v866, %v875
      %v877 = vmul.f32 %v867, %v875
      %v878 = vmul.f32 %v868, %v875
      %v879 = vmul.f32 %v869, %v875
      %v880 = vmul.f32 %v870, %v875
      %v881 = vmul.f32 %v871, %v875
      %v882 = vmul.f32 %v872, %v875
      %v883 = vmul.f32 %v873, %v875
      %v884 = vadd.f32 %v858, %v876
      %v885 = vadd.f32 %v859, %v877
      %v886 = vadd.f32 %v860, %v878
      %v887 = vadd.f32 %v861, %v879
      %v888 = vadd.f32 %v862, %v880
      %v889 = vadd.f32 %v863, %v881
      %v890 = vadd.f32 %v864, %v882
      %v891 = vadd.f32 %v865, %v883
      %v892 = vld [vmem:[#allocation2 + $0x2] sm:$0xff]
      %v893 = vld [vmem:[#allocation2 + $0x12] sm:$0xff]
      %v894 = vld [vmem:[#allocation2 + $0x22] sm:$0xff]
      %v895 = vld [vmem:[#allocation2 + $0x32] sm:$0xff]
      %v896 = vld [vmem:[#allocation2 + $0x42] sm:$0xff]
      %v897 = vld [vmem:[#allocation2 + $0x52] sm:$0xff]
      %v898 = vld [vmem:[#allocation2 + $0x62] sm:$0xff]
      %v899 = vld [vmem:[#allocation2 + $0x72] sm:$0xff]
      %v900 = vld [vmem:[%s1 + $0x2] sm:$0x1]
      %v901 = vperm.slane %v900, 0
      %v902 = vmul.f32 %v892, %v901
      %v903 = vmul.f32 %v893, %v901
      %v904 = vmul.f32 %v894, %v901
      %v905 = vmul.f32 %v895, %v901
      %v906 = vmul.f32 %v896, %v901
      %v907 = vmul.f32 %v897, %v901
      %v908 = vmul.f32 %v898, %v901
      %v909 = vmul.f32 %v899, %v901
      %v910 = vadd.f32 %v884, %v902
      %v911 = vadd.f32 %v885, %v903
      %v912 = vadd.f32 %v886, %v904
      %v913 = vadd.f32 %v887, %v905
      %v914 = vadd.f32 %v888, %v906
      %v915 = vadd.f32 %v889, %v907
      %v916 = vadd.f32 %v890, %v908
      %v917 = vadd.f32 %v891, %v909
      %v918 = vld [vmem:[#allocation2 + $0x3] sm:$0xff]
      %v919 = vld [vmem:[#allocation2 + $0x13] sm:$0xff]
      %v920 = vld [vmem:[#allocation2 + $0x23] sm:$0xff]
      %v921 = vld [vmem:[#allocation2 + $0x33] sm:$0xff]
      %v922 = vld [vmem:[#allocation2 + $0x43] sm:$0xff]
      %v923 = vld [vmem:[#allocation2 + $0x53] sm:$0xff]
      %v924 = vld [vmem:[#allocation2 + $0x63] sm:$0xff]
      %v925 = vld [vmem:[#allocation2 + $0x73] sm:$0xff]
      %v926 = vld [vmem:[%s1 + $0x3] sm:$0x1]
      %v927 = vperm.slane %v926, 0
      %v928 = vmul.f32 %v918, %v927
      %v929 = vmul.f32 %v919, %v927
      %v930 = vmul.f32 %v920, %v927
      %v931 = vmul.f32 %v921, %v927
      %v932 = vmul.f32 %v922, %v927
      %v933 = vmul.f32 %v923, %v927
      %v934 = vmul.f32 %v924, %v927
      %v935 = vmul.f32 %v925, %v927
      %v936 = vadd.f32 %v910, %v928
      %v937 = vadd.f32 %v911, %v929
      %v938 = vadd.f32 %v912, %v930
      %v939 = vadd.f32 %v913, %v931
      %v940 = vadd.f32 %v914, %v932
      %v941 = vadd.f32 %v915, %v933
      %v942 = vadd.f32 %v916, %v934
      %v943 = vadd.f32 %v917, %v935
      %v944 = vld [vmem:[#allocation2 + $0x4] sm:$0xff]
      %v945 = vld [vmem:[#allocation2 + $0x14] sm:$0xff]
      %v946 = vld [vmem:[#allocation2 + $0x24] sm:$0xff]
      %v947 = vld [vmem:[#allocation2 + $0x34] sm:$0xff]
      %v948 = vld [vmem:[#allocation2 + $0x44] sm:$0xff]
      %v949 = vld [vmem:[#allocation2 + $0x54] sm:$0xff]
      %v950 = vld [vmem:[#allocation2 + $0x64] sm:$0xff]
      %v951 = vld [vmem:[#allocation2 + $0x74] sm:$0xff]
      %v952 = vld [vmem:[%s1 + $0x4] sm:$0x1]
      %v953 = vperm.slane %v952, 0
      %v954 = vmul.f32 %v944, %v953
      %v955 = vmul.f32 %v945, %v953
      %v956 = vmul.f32 %v946, %v953
      %v957 = vmul.f32 %v947, %v953
      %v958 = vmul.f32 %v948, %v953
      %v959 = vmul.f32 %v949, %v953
      %v960 = vmul.f32 %v950, %v953
      %v961 = vmul.f32 %v951, %v953
      %v962 = vadd.f32 %v936, %v954
      %v963 = vadd.f32 %v937, %v955
      %v964 = vadd.f32 %v938, %v956
      %v965 = vadd.f32 %v939, %v957
      %v966 = vadd.f32 %v940, %v958
      %v967 = vadd.f32 %v941, %v959
      %v968 = vadd.f32 %v942, %v960
      %v969 = vadd.f32 %v943, %v961
      %v970 = vld [vmem:[%s357] sm:$0xff]
      %v971 = vld [vmem:[%s357 + $0x10] sm:$0xff]
      %v972 = vld [vmem:[%s357 + $0x20] sm:$0xff]
      %v973 = vld [vmem:[%s357 + $0x30] sm:$0xff]
      %v974 = vld [vmem:[%s357 + $0x40] sm:$0xff]
      %v975 = vld [vmem:[%s357 + $0x50] sm:$0xff]
      %v976 = vld [vmem:[%s357 + $0x60] sm:$0xff]
      %v977 = vld [vmem:[%s357 + $0x70] sm:$0xff]
      %s978 = scalar_lea.vmem %s1, 8
      %v979 = vld [vmem:[%s978] sm:$0x1]
      %v980 = vperm.slane %v979, 0
      %v981 = vmul.f32 %v970, %v980
      %v982 = vmul.f32 %v971, %v980
      %v983 = vmul.f32 %v972, %v980
      %v984 = vmul.f32 %v973, %v980
      %v985 = vmul.f32 %v974, %v980
      %v986 = vmul.f32 %v975, %v980
      %v987 = vmul.f32 %v976, %v980
      %v988 = vmul.f32 %v977, %v980
      %v989 = vadd.f32 %v962, %v981
      %v990 = vadd.f32 %v963, %v982
      %v991 = vadd.f32 %v964, %v983
      %v992 = vadd.f32 %v965, %v984
      %v993 = vadd.f32 %v966, %v985
      %v994 = vadd.f32 %v967, %v986
      %v995 = vadd.f32 %v968, %v987
      %v996 = vadd.f32 %v969, %v988
      %v997 = vld [vmem:[%s357 + $0x1] sm:$0xff]
      %v998 = vld [vmem:[%s357 + $0x11] sm:$0xff]
      %v999 = vld [vmem:[%s357 + $0x21] sm:$0xff]
      %v1000 = vld [vmem:[%s357 + $0x31] sm:$0xff]
      %v1001 = vld [vmem:[%s357 + $0x41] sm:$0xff]
      %v1002 = vld [vmem:[%s357 + $0x51] sm:$0xff]
      %v1003 = vld [vmem:[%s357 + $0x61] sm:$0xff]
      %v1004 = vld [vmem:[%s357 + $0x71] sm:$0xff]
      %v1005 = vld [vmem:[%s978 + $0x1] sm:$0x1]
      %v1006 = vperm.slane %v1005, 0
      %v1007 = vmul.f32 %v997, %v1006
      %v1008 = vmul.f32 %v998, %v1006
      %v1009 = vmul.f32 %v999, %v1006
      %v1010 = vmul.f32 %v1000, %v1006
      %v1011 = vmul.f32 %v1001, %v1006
      %v1012 = vmul.f32 %v1002, %v1006
      %v1013 = vmul.f32 %v1003, %v1006
      %v1014 = vmul.f32 %v1004, %v1006
      %v1015 = vadd.f32 %v989, %v1007
      %v1016 = vadd.f32 %v990, %v1008
      %v1017 = vadd.f32 %v991, %v1009
      %v1018 = vadd.f32 %v992, %v1010
      %v1019 = vadd.f32 %v993, %v1011
      %v1020 = vadd.f32 %v994, %v1012
      %v1021 = vadd.f32 %v995, %v1013
      %v1022 = vadd.f32 %v996, %v1014
      %v1023 = vld [vmem:[%s357 + $0x2] sm:$0xff]
      %v1024 = vld [vmem:[%s357 + $0x12] sm:$0xff]
      %v1025 = vld [vmem:[%s357 + $0x22] sm:$0xff]
      %v1026 = vld [vmem:[%s357 + $0x32] sm:$0xff]
      %v1027 = vld [vmem:[%s357 + $0x42] sm:$0xff]
      %v1028 = vld [vmem:[%s357 + $0x52] sm:$0xff]
      %v1029 = vld [vmem:[%s357 + $0x62] sm:$0xff]
      %v1030 = vld [vmem:[%s357 + $0x72] sm:$0xff]
      %v1031 = vld [vmem:[%s978 + $0x2] sm:$0x1]
      %v1032 = vperm.slane %v1031, 0
      %v1033 = vmul.f32 %v1023, %v1032
      %v1034 = vmul.f32 %v1024, %v1032
      %v1035 = vmul.f32 %v1025, %v1032
      %v1036 = vmul.f32 %v1026, %v1032
      %v1037 = vmul.f32 %v1027, %v1032
      %v1038 = vmul.f32 %v1028, %v1032
      %v1039 = vmul.f32 %v1029, %v1032
      %v1040 = vmul.f32 %v1030, %v1032
      %v1041 = vadd.f32 %v1015, %v1033
      %v1042 = vadd.f32 %v1016, %v1034
      %v1043 = vadd.f32 %v1017, %v1035
      %v1044 = vadd.f32 %v1018, %v1036
      %v1045 = vadd.f32 %v1019, %v1037
      %v1046 = vadd.f32 %v1020, %v1038
      %v1047 = vadd.f32 %v1021, %v1039
      %v1048 = vadd.f32 %v1022, %v1040
      %v1049 = vld [vmem:[%s357 + $0x3] sm:$0xff]
      %v1050 = vld [vmem:[%s357 + $0x13] sm:$0xff]
      %v1051 = vld [vmem:[%s357 + $0x23] sm:$0xff]
      %v1052 = vld [vmem:[%s357 + $0x33] sm:$0xff]
      %v1053 = vld [vmem:[%s357 + $0x43] sm:$0xff]
      %v1054 = vld [vmem:[%s357 + $0x53] sm:$0xff]
      %v1055 = vld [vmem:[%s357 + $0x63] sm:$0xff]
      %v1056 = vld [vmem:[%s357 + $0x73] sm:$0xff]
      %v1057 = vld [vmem:[%s978 + $0x3] sm:$0x1]
      %v1058 = vperm.slane %v1057, 0
      %v1059 = vmul.f32 %v1049, %v1058
      %v1060 = vmul.f32 %v1050, %v1058
      %v1061 = vmul.f32 %v1051, %v1058
      %v1062 = vmul.f32 %v1052, %v1058
      %v1063 = vmul.f32 %v1053, %v1058
      %v1064 = vmul.f32 %v1054, %v1058
      %v1065 = vmul.f32 %v1055, %v1058
      %v1066 = vmul.f32 %v1056, %v1058
      %v1067 = vadd.f32 %v1041, %v1059
      %v1068 = vadd.f32 %v1042, %v1060
      %v1069 = vadd.f32 %v1043, %v1061
      %v1070 = vadd.f32 %v1044, %v1062
      %v1071 = vadd.f32 %v1045, %v1063
      %v1072 = vadd.f32 %v1046, %v1064
      %v1073 = vadd.f32 %v1047, %v1065
      %v1074 = vadd.f32 %v1048, %v1066
      %v1075 = vld [vmem:[%s357 + $0x4] sm:$0xff]
      %v1076 = vld [vmem:[%s357 + $0x14] sm:$0xff]
      %v1077 = vld [vmem:[%s357 + $0x24] sm:$0xff]
      %v1078 = vld [vmem:[%s357 + $0x34] sm:$0xff]
      %v1079 = vld [vmem:[%s357 + $0x44] sm:$0xff]
      %v1080 = vld [vmem:[%s357 + $0x54] sm:$0xff]
      %v1081 = vld [vmem:[%s357 + $0x64] sm:$0xff]
      %v1082 = vld [vmem:[%s357 + $0x74] sm:$0xff]
      %v1083 = vld [vmem:[%s978 + $0x4] sm:$0x1]
      %v1084 = vperm.slane %v1083, 0
      %v1085 = vmul.f32 %v1075, %v1084
      %v1086 = vmul.f32 %v1076, %v1084
      %v1087 = vmul.f32 %v1077, %v1084
      %v1088 = vmul.f32 %v1078, %v1084
      %v1089 = vmul.f32 %v1079, %v1084
      %v1090 = vmul.f32 %v1080, %v1084
      %v1091 = vmul.f32 %v1081, %v1084
      %v1092 = vmul.f32 %v1082, %v1084
      %v1093 = vadd.f32 %v1067, %v1085
      %v1094 = vadd.f32 %v1068, %v1086
      %v1095 = vadd.f32 %v1069, %v1087
      %v1096 = vadd.f32 %v1070, %v1088
      %v1097 = vadd.f32 %v1071, %v1089
      %v1098 = vadd.f32 %v1072, %v1090
      %v1099 = vadd.f32 %v1073, %v1091
      %v1100 = vadd.f32 %v1074, %v1092
      %v1101 = vld [vmem:[%s264] sm:$0xff]
      %v1102 = vld [vmem:[%s264 + $0x10] sm:$0xff]
      %v1103 = vld [vmem:[%s264 + $0x20] sm:$0xff]
      %v1104 = vld [vmem:[%s264 + $0x30] sm:$0xff]
      %v1105 = vld [vmem:[%s264 + $0x40] sm:$0xff]
      %v1106 = vld [vmem:[%s264 + $0x50] sm:$0xff]
      %v1107 = vld [vmem:[%s264 + $0x60] sm:$0xff]
      %v1108 = vld [vmem:[%s264 + $0x70] sm:$0xff]
      %s1109 = scalar_lea.vmem %s1, 16
      %v1110 = vld [vmem:[%s1109] sm:$0x1]
      %v1111 = vperm.slane %v1110, 0
      %v1112 = vmul.f32 %v1101, %v1111
      %v1113 = vmul.f32 %v1102, %v1111
      %v1114 = vmul.f32 %v1103, %v1111
      %v1115 = vmul.f32 %v1104, %v1111
      %v1116 = vmul.f32 %v1105, %v1111
      %v1117 = vmul.f32 %v1106, %v1111
      %v1118 = vmul.f32 %v1107, %v1111
      %v1119 = vmul.f32 %v1108, %v1111
      %v1120 = vadd.f32 %v1093, %v1112
      %v1121 = vadd.f32 %v1094, %v1113
      %v1122 = vadd.f32 %v1095, %v1114
      %v1123 = vadd.f32 %v1096, %v1115
      %v1124 = vadd.f32 %v1097, %v1116
      %v1125 = vadd.f32 %v1098, %v1117
      %v1126 = vadd.f32 %v1099, %v1118
      %v1127 = vadd.f32 %v1100, %v1119
      %v1128 = vld [vmem:[%s264 + $0x1] sm:$0xff]
      %v1129 = vld [vmem:[%s264 + $0x11] sm:$0xff]
      %v1130 = vld [vmem:[%s264 + $0x21] sm:$0xff]
      %v1131 = vld [vmem:[%s264 + $0x31] sm:$0xff]
      %v1132 = vld [vmem:[%s264 + $0x41] sm:$0xff]
      %v1133 = vld [vmem:[%s264 + $0x51] sm:$0xff]
      %v1134 = vld [vmem:[%s264 + $0x61] sm:$0xff]
      %v1135 = vld [vmem:[%s264 + $0x71] sm:$0xff]
      %v1136 = vld [vmem:[%s1109 + $0x1] sm:$0x1]
      %v1137 = vperm.slane %v1136, 0
      %v1138 = vmul.f32 %v1128, %v1137
      %v1139 = vmul.f32 %v1129, %v1137
      %v1140 = vmul.f32 %v1130, %v1137
      %v1141 = vmul.f32 %v1131, %v1137
      %v1142 = vmul.f32 %v1132, %v1137
      %v1143 = vmul.f32 %v1133, %v1137
      %v1144 = vmul.f32 %v1134, %v1137
      %v1145 = vmul.f32 %v1135, %v1137
      %v1146 = vadd.f32 %v1120, %v1138
      %v1147 = vadd.f32 %v1121, %v1139
      %v1148 = vadd.f32 %v1122, %v1140
      %v1149 = vadd.f32 %v1123, %v1141
      %v1150 = vadd.f32 %v1124, %v1142
      %v1151 = vadd.f32 %v1125, %v1143
      %v1152 = vadd.f32 %v1126, %v1144
      %v1153 = vadd.f32 %v1127, %v1145
      %v1154 = vld [vmem:[%s264 + $0x2] sm:$0xff]
      %v1155 = vld [vmem:[%s264 + $0x12] sm:$0xff]
      %v1156 = vld [vmem:[%s264 + $0x22] sm:$0xff]
      %v1157 = vld [vmem:[%s264 + $0x32] sm:$0xff]
      %v1158 = vld [vmem:[%s264 + $0x42] sm:$0xff]
      %v1159 = vld [vmem:[%s264 + $0x52] sm:$0xff]
      %v1160 = vld [vmem:[%s264 + $0x62] sm:$0xff]
      %v1161 = vld [vmem:[%s264 + $0x72] sm:$0xff]
      %v1162 = vld [vmem:[%s1109 + $0x2] sm:$0x1]
      %v1163 = vperm.slane %v1162, 0
      %v1164 = vmul.f32 %v1154, %v1163
      %v1165 = vmul.f32 %v1155, %v1163
      %v1166 = vmul.f32 %v1156, %v1163
      %v1167 = vmul.f32 %v1157, %v1163
      %v1168 = vmul.f32 %v1158, %v1163
      %v1169 = vmul.f32 %v1159, %v1163
      %v1170 = vmul.f32 %v1160, %v1163
      %v1171 = vmul.f32 %v1161, %v1163
      %v1172 = vadd.f32 %v1146, %v1164
      %v1173 = vadd.f32 %v1147, %v1165
      %v1174 = vadd.f32 %v1148, %v1166
      %v1175 = vadd.f32 %v1149, %v1167
      %v1176 = vadd.f32 %v1150, %v1168
      %v1177 = vadd.f32 %v1151, %v1169
      %v1178 = vadd.f32 %v1152, %v1170
      %v1179 = vadd.f32 %v1153, %v1171
      %v1180 = vld [vmem:[%s264 + $0x3] sm:$0xff]
      %v1181 = vld [vmem:[%s264 + $0x13] sm:$0xff]
      %v1182 = vld [vmem:[%s264 + $0x23] sm:$0xff]
      %v1183 = vld [vmem:[%s264 + $0x33] sm:$0xff]
      %v1184 = vld [vmem:[%s264 + $0x43] sm:$0xff]
      %v1185 = vld [vmem:[%s264 + $0x53] sm:$0xff]
      %v1186 = vld [vmem:[%s264 + $0x63] sm:$0xff]
      %v1187 = vld [vmem:[%s264 + $0x73] sm:$0xff]
      %v1188 = vld [vmem:[%s1109 + $0x3] sm:$0x1]
      %v1189 = vperm.slane %v1188, 0
      %v1190 = vmul.f32 %v1180, %v1189
      %v1191 = vmul.f32 %v1181, %v1189
      %v1192 = vmul.f32 %v1182, %v1189
      %v1193 = vmul.f32 %v1183, %v1189
      %v1194 = vmul.f32 %v1184, %v1189
      %v1195 = vmul.f32 %v1185, %v1189
      %v1196 = vmul.f32 %v1186, %v1189
      %v1197 = vmul.f32 %v1187, %v1189
      %v1198 = vadd.f32 %v1172, %v1190
      %v1199 = vadd.f32 %v1173, %v1191
      %v1200 = vadd.f32 %v1174, %v1192
      %v1201 = vadd.f32 %v1175, %v1193
      %v1202 = vadd.f32 %v1176, %v1194
      %v1203 = vadd.f32 %v1177, %v1195
      %v1204 = vadd.f32 %v1178, %v1196
      %v1205 = vadd.f32 %v1179, %v1197
      %v1206 = vld [vmem:[%s264 + $0x4] sm:$0xff]
      %v1207 = vld [vmem:[%s264 + $0x14] sm:$0xff]
      %v1208 = vld [vmem:[%s264 + $0x24] sm:$0xff]
      %v1209 = vld [vmem:[%s264 + $0x34] sm:$0xff]
      %v1210 = vld [vmem:[%s264 + $0x44] sm:$0xff]
      %v1211 = vld [vmem:[%s264 + $0x54] sm:$0xff]
      %v1212 = vld [vmem:[%s264 + $0x64] sm:$0xff]
      %v1213 = vld [vmem:[%s264 + $0x74] sm:$0xff]
      %v1214 = vld [vmem:[%s1109 + $0x4] sm:$0x1]
      %v1215 = vperm.slane %v1214, 0
      %v1216 = vmul.f32 %v1206, %v1215
      %v1217 = vmul.f32 %v1207, %v1215
      %v1218 = vmul.f32 %v1208, %v1215
      %v1219 = vmul.f32 %v1209, %v1215
      %v1220 = vmul.f32 %v1210, %v1215
      %v1221 = vmul.f32 %v1211, %v1215
      %v1222 = vmul.f32 %v1212, %v1215
      %v1223 = vmul.f32 %v1213, %v1215
      %v1224 = vadd.f32 %v1198, %v1216
      %v1225 = vadd.f32 %v1199, %v1217
      %v1226 = vadd.f32 %v1200, %v1218
      %v1227 = vadd.f32 %v1201, %v1219
      %v1228 = vadd.f32 %v1202, %v1220
      %v1229 = vadd.f32 %v1203, %v1221
      %v1230 = vadd.f32 %v1204, %v1222
      %v1231 = vadd.f32 %v1205, %v1223
      %v1232 = vld [vmem:[%s406] sm:$0xff]
      %v1233 = vld [vmem:[%s406 + $0x10] sm:$0xff]
      %v1234 = vld [vmem:[%s406 + $0x20] sm:$0xff]
      %v1235 = vld [vmem:[%s406 + $0x30] sm:$0xff]
      %v1236 = vld [vmem:[%s406 + $0x40] sm:$0xff]
      %v1237 = vld [vmem:[%s406 + $0x50] sm:$0xff]
      %v1238 = vld [vmem:[%s406 + $0x60] sm:$0xff]
      %v1239 = vld [vmem:[%s406 + $0x70] sm:$0xff]
      %s1240 = scalar_lea.vmem %s1, 24
      %v1241 = vld [vmem:[%s1240] sm:$0x1]
      %v1242 = vperm.slane %v1241, 0
      %v1243 = vmul.f32 %v1232, %v1242
      %v1244 = vmul.f32 %v1233, %v1242
      %v1245 = vmul.f32 %v1234, %v1242
      %v1246 = vmul.f32 %v1235, %v1242
      %v1247 = vmul.f32 %v1236, %v1242
      %v1248 = vmul.f32 %v1237, %v1242
      %v1249 = vmul.f32 %v1238, %v1242
      %v1250 = vmul.f32 %v1239, %v1242
      %v1251 = vadd.f32 %v1224, %v1243
      %v1252 = vadd.f32 %v1225, %v1244
      %v1253 = vadd.f32 %v1226, %v1245
      %v1254 = vadd.f32 %v1227, %v1246
      %v1255 = vadd.f32 %v1228, %v1247
      %v1256 = vadd.f32 %v1229, %v1248
      %v1257 = vadd.f32 %v1230, %v1249
      %v1258 = vadd.f32 %v1231, %v1250
      %v1259 = vld [vmem:[%s406 + $0x1] sm:$0xff]
      %v1260 = vld [vmem:[%s406 + $0x11] sm:$0xff]
      %v1261 = vld [vmem:[%s406 + $0x21] sm:$0xff]
      %v1262 = vld [vmem:[%s406 + $0x31] sm:$0xff]
      %v1263 = vld [vmem:[%s406 + $0x41] sm:$0xff]
      %v1264 = vld [vmem:[%s406 + $0x51] sm:$0xff]
      %v1265 = vld [vmem:[%s406 + $0x61] sm:$0xff]
      %v1266 = vld [vmem:[%s406 + $0x71] sm:$0xff]
      %v1267 = vld [vmem:[%s1240 + $0x1] sm:$0x1]
      %v1268 = vperm.slane %v1267, 0
      %v1269 = vmul.f32 %v1259, %v1268
      %v1270 = vmul.f32 %v1260, %v1268
      %v1271 = vmul.f32 %v1261, %v1268
      %v1272 = vmul.f32 %v1262, %v1268
      %v1273 = vmul.f32 %v1263, %v1268
      %v1274 = vmul.f32 %v1264, %v1268
      %v1275 = vmul.f32 %v1265, %v1268
      %v1276 = vmul.f32 %v1266, %v1268
      %v1277 = vadd.f32 %v1251, %v1269
      %v1278 = vadd.f32 %v1252, %v1270
      %v1279 = vadd.f32 %v1253, %v1271
      %v1280 = vadd.f32 %v1254, %v1272
      %v1281 = vadd.f32 %v1255, %v1273
      %v1282 = vadd.f32 %v1256, %v1274
      %v1283 = vadd.f32 %v1257, %v1275
      %v1284 = vadd.f32 %v1258, %v1276
      %v1285 = vld [vmem:[%s406 + $0x2] sm:$0xff]
      %v1286 = vld [vmem:[%s406 + $0x12] sm:$0xff]
      %v1287 = vld [vmem:[%s406 + $0x22] sm:$0xff]
      %v1288 = vld [vmem:[%s406 + $0x32] sm:$0xff]
      %v1289 = vld [vmem:[%s406 + $0x42] sm:$0xff]
      %v1290 = vld [vmem:[%s406 + $0x52] sm:$0xff]
      %v1291 = vld [vmem:[%s406 + $0x62] sm:$0xff]
      %v1292 = vld [vmem:[%s406 + $0x72] sm:$0xff]
      %v1293 = vld [vmem:[%s1240 + $0x2] sm:$0x1]
      %v1294 = vperm.slane %v1293, 0
      %v1295 = vmul.f32 %v1285, %v1294
      %v1296 = vmul.f32 %v1286, %v1294
      %v1297 = vmul.f32 %v1287, %v1294
      %v1298 = vmul.f32 %v1288, %v1294
      %v1299 = vmul.f32 %v1289, %v1294
      %v1300 = vmul.f32 %v1290, %v1294
      %v1301 = vmul.f32 %v1291, %v1294
      %v1302 = vmul.f32 %v1292, %v1294
      %v1303 = vadd.f32 %v1277, %v1295
      %v1304 = vadd.f32 %v1278, %v1296
      %v1305 = vadd.f32 %v1279, %v1297
      %v1306 = vadd.f32 %v1280, %v1298
      %v1307 = vadd.f32 %v1281, %v1299
      %v1308 = vadd.f32 %v1282, %v1300
      %v1309 = vadd.f32 %v1283, %v1301
      %v1310 = vadd.f32 %v1284, %v1302
      %v1311 = vld [vmem:[%s406 + $0x3] sm:$0xff]
      %v1312 = vld [vmem:[%s406 + $0x13] sm:$0xff]
      %v1313 = vld [vmem:[%s406 + $0x23] sm:$0xff]
      %v1314 = vld [vmem:[%s406 + $0x33] sm:$0xff]
      %v1315 = vld [vmem:[%s406 + $0x43] sm:$0xff]
      %v1316 = vld [vmem:[%s406 + $0x53] sm:$0xff]
      %v1317 = vld [vmem:[%s406 + $0x63] sm:$0xff]
      %v1318 = vld [vmem:[%s406 + $0x73] sm:$0xff]
      %v1319 = vld [vmem:[%s1240 + $0x3] sm:$0x1]
      %v1320 = vperm.slane %v1319, 0
      %v1321 = vmul.f32 %v1311, %v1320
      %v1322 = vmul.f32 %v1312, %v1320
      %v1323 = vmul.f32 %v1313, %v1320
      %v1324 = vmul.f32 %v1314, %v1320
      %v1325 = vmul.f32 %v1315, %v1320
      %v1326 = vmul.f32 %v1316, %v1320
      %v1327 = vmul.f32 %v1317, %v1320
      %v1328 = vmul.f32 %v1318, %v1320
      %v1329 = vadd.f32 %v1303, %v1321
      %v1330 = vadd.f32 %v1304, %v1322
      %v1331 = vadd.f32 %v1305, %v1323
      %v1332 = vadd.f32 %v1306, %v1324
      %v1333 = vadd.f32 %v1307, %v1325
      %v1334 = vadd.f32 %v1308, %v1326
      %v1335 = vadd.f32 %v1309, %v1327
      %v1336 = vadd.f32 %v1310, %v1328
      %v1337 = vld [vmem:[%s406 + $0x4] sm:$0xff]
      %v1338 = vld [vmem:[%s406 + $0x14] sm:$0xff]
      %v1339 = vld [vmem:[%s406 + $0x24] sm:$0xff]
      %v1340 = vld [vmem:[%s406 + $0x34] sm:$0xff]
      %v1341 = vld [vmem:[%s406 + $0x44] sm:$0xff]
      %v1342 = vld [vmem:[%s406 + $0x54] sm:$0xff]
      %v1343 = vld [vmem:[%s406 + $0x64] sm:$0xff]
      %v1344 = vld [vmem:[%s406 + $0x74] sm:$0xff]
      %v1345 = vld [vmem:[%s1240 + $0x4] sm:$0x1]
      %v1346 = vperm.slane %v1345, 0
      %v1347 = vmul.f32 %v1337, %v1346
      %v1348 = vmul.f32 %v1338, %v1346
      %v1349 = vmul.f32 %v1339, %v1346
      %v1350 = vmul.f32 %v1340, %v1346
      %v1351 = vmul.f32 %v1341, %v1346
      %v1352 = vmul.f32 %v1342, %v1346
      %v1353 = vmul.f32 %v1343, %v1346
      %v1354 = vmul.f32 %v1344, %v1346
      %v1355 = vadd.f32 %v1329, %v1347
      %v1356 = vadd.f32 %v1330, %v1348
      %v1357 = vadd.f32 %v1331, %v1349
      %v1358 = vadd.f32 %v1332, %v1350
      %v1359 = vadd.f32 %v1333, %v1351
      %v1360 = vadd.f32 %v1334, %v1352
      %v1361 = vadd.f32 %v1335, %v1353
      %v1362 = vadd.f32 %v1336, %v1354
      %s1363 = scalar_lea.vmem [#allocation2], 64
      %v1364 = vld [vmem:[%s1363] sm:$0xff]
      %v1365 = vld [vmem:[%s1363 + $0x10] sm:$0xff]
      %v1366 = vld [vmem:[%s1363 + $0x20] sm:$0xff]
      %v1367 = vld [vmem:[%s1363 + $0x30] sm:$0xff]
      %v1368 = vld [vmem:[%s1363 + $0x40] sm:$0xff]
      %v1369 = vld [vmem:[%s1363 + $0x50] sm:$0xff]
      %v1370 = vld [vmem:[%s1363 + $0x60] sm:$0xff]
      %v1371 = vld [vmem:[%s1363 + $0x70] sm:$0xff]
      %s1372 = scalar_lea.vmem %s1, 32
      %v1373 = vld [vmem:[%s1372] sm:$0x1]
      %v1374 = vperm.slane %v1373, 0
      %v1375 = vmul.f32 %v1364, %v1374
      %v1376 = vmul.f32 %v1365, %v1374
      %v1377 = vmul.f32 %v1366, %v1374
      %v1378 = vmul.f32 %v1367, %v1374
      %v1379 = vmul.f32 %v1368, %v1374
      %v1380 = vmul.f32 %v1369, %v1374
      %v1381 = vmul.f32 %v1370, %v1374
      %v1382 = vmul.f32 %v1371, %v1374
      %v1383 = vadd.f32 %v1355, %v1375
      %v1384 = vadd.f32 %v1356, %v1376
      %v1385 = vadd.f32 %v1357, %v1377
      %v1386 = vadd.f32 %v1358, %v1378
      %v1387 = vadd.f32 %v1359, %v1379
      %v1388 = vadd.f32 %v1360, %v1380
      %v1389 = vadd.f32 %v1361, %v1381
      %v1390 = vadd.f32 %v1362, %v1382
      %v1391 = vld [vmem:[%s1363 + $0x1] sm:$0xff]
      %v1392 = vld [vmem:[%s1363 + $0x11] sm:$0xff]
      %v1393 = vld [vmem:[%s1363 + $0x21] sm:$0xff]
      %v1394 = vld [vmem:[%s1363 + $0x31] sm:$0xff]
      %v1395 = vld [vmem:[%s1363 + $0x41] sm:$0xff]
      %v1396 = vld [vmem:[%s1363 + $0x51] sm:$0xff]
      %v1397 = vld [vmem:[%s1363 + $0x61] sm:$0xff]
      %v1398 = vld [vmem:[%s1363 + $0x71] sm:$0xff]
      %v1399 = vld [vmem:[%s1372 + $0x1] sm:$0x1]
      %v1400 = vperm.slane %v1399, 0
      %v1401 = vmul.f32 %v1391, %v1400
      %v1402 = vmul.f32 %v1392, %v1400
      %v1403 = vmul.f32 %v1393, %v1400
      %v1404 = vmul.f32 %v1394, %v1400
      %v1405 = vmul.f32 %v1395, %v1400
      %v1406 = vmul.f32 %v1396, %v1400
      %v1407 = vmul.f32 %v1397, %v1400
      %v1408 = vmul.f32 %v1398, %v1400
      %v1409 = vadd.f32 %v1383, %v1401
      %v1410 = vadd.f32 %v1384, %v1402
      %v1411 = vadd.f32 %v1385, %v1403
      %v1412 = vadd.f32 %v1386, %v1404
      %v1413 = vadd.f32 %v1387, %v1405
      %v1414 = vadd.f32 %v1388, %v1406
      %v1415 = vadd.f32 %v1389, %v1407
      %v1416 = vadd.f32 %v1390, %v1408
      %v1417 = vld [vmem:[%s1363 + $0x2] sm:$0xff]
      %v1418 = vld [vmem:[%s1363 + $0x12] sm:$0xff]
      %v1419 = vld [vmem:[%s1363 + $0x22] sm:$0xff]
      %v1420 = vld [vmem:[%s1363 + $0x32] sm:$0xff]
      %v1421 = vld [vmem:[%s1363 + $0x42] sm:$0xff]
      %v1422 = vld [vmem:[%s1363 + $0x52] sm:$0xff]
      %v1423 = vld [vmem:[%s1363 + $0x62] sm:$0xff]
      %v1424 = vld [vmem:[%s1363 + $0x72] sm:$0xff]
      %v1425 = vld [vmem:[%s1372 + $0x2] sm:$0x1]
      %v1426 = vperm.slane %v1425, 0
      %v1427 = vmul.f32 %v1417, %v1426
      %v1428 = vmul.f32 %v1418, %v1426
      %v1429 = vmul.f32 %v1419, %v1426
      %v1430 = vmul.f32 %v1420, %v1426
      %v1431 = vmul.f32 %v1421, %v1426
      %v1432 = vmul.f32 %v1422, %v1426
      %v1433 = vmul.f32 %v1423, %v1426
      %v1434 = vmul.f32 %v1424, %v1426
      %v1435 = vadd.f32 %v1409, %v1427
      %v1436 = vadd.f32 %v1410, %v1428
      %v1437 = vadd.f32 %v1411, %v1429
      %v1438 = vadd.f32 %v1412, %v1430
      %v1439 = vadd.f32 %v1413, %v1431
      %v1440 = vadd.f32 %v1414, %v1432
      %v1441 = vadd.f32 %v1415, %v1433
      %v1442 = vadd.f32 %v1416, %v1434
      %v1443 = vld [vmem:[%s1363 + $0x3] sm:$0xff]
      %v1444 = vld [vmem:[%s1363 + $0x13] sm:$0xff]
      %v1445 = vld [vmem:[%s1363 + $0x23] sm:$0xff]
      %v1446 = vld [vmem:[%s1363 + $0x33] sm:$0xff]
      %v1447 = vld [vmem:[%s1363 + $0x43] sm:$0xff]
      %v1448 = vld [vmem:[%s1363 + $0x53] sm:$0xff]
      %v1449 = vld [vmem:[%s1363 + $0x63] sm:$0xff]
      %v1450 = vld [vmem:[%s1363 + $0x73] sm:$0xff]
      %v1451 = vld [vmem:[%s1372 + $0x3] sm:$0x1]
      %v1452 = vperm.slane %v1451, 0
      %v1453 = vmul.f32 %v1443, %v1452
      %v1454 = vmul.f32 %v1444, %v1452
      %v1455 = vmul.f32 %v1445, %v1452
      %v1456 = vmul.f32 %v1446, %v1452
      %v1457 = vmul.f32 %v1447, %v1452
      %v1458 = vmul.f32 %v1448, %v1452
      %v1459 = vmul.f32 %v1449, %v1452
      %v1460 = vmul.f32 %v1450, %v1452
      %v1461 = vadd.f32 %v1435, %v1453
      %v1462 = vadd.f32 %v1436, %v1454
      %v1463 = vadd.f32 %v1437, %v1455
      %v1464 = vadd.f32 %v1438, %v1456
      %v1465 = vadd.f32 %v1439, %v1457
      %v1466 = vadd.f32 %v1440, %v1458
      %v1467 = vadd.f32 %v1441, %v1459
      %v1468 = vadd.f32 %v1442, %v1460
      %v1469 = vld [vmem:[%s1363 + $0x4] sm:$0xff]
      %v1470 = vld [vmem:[%s1363 + $0x14] sm:$0xff]
      %v1471 = vld [vmem:[%s1363 + $0x24] sm:$0xff]
      %v1472 = vld [vmem:[%s1363 + $0x34] sm:$0xff]
      %v1473 = vld [vmem:[%s1363 + $0x44] sm:$0xff]
      %v1474 = vld [vmem:[%s1363 + $0x54] sm:$0xff]
      %v1475 = vld [vmem:[%s1363 + $0x64] sm:$0xff]
      %v1476 = vld [vmem:[%s1363 + $0x74] sm:$0xff]
      %v1477 = vld [vmem:[%s1372 + $0x4] sm:$0x1]
      %v1478 = vperm.slane %v1477, 0
      %v1479 = vmul.f32 %v1469, %v1478
      %v1480 = vmul.f32 %v1470, %v1478
      %v1481 = vmul.f32 %v1471, %v1478
      %v1482 = vmul.f32 %v1472, %v1478
      %v1483 = vmul.f32 %v1473, %v1478
      %v1484 = vmul.f32 %v1474, %v1478
      %v1485 = vmul.f32 %v1475, %v1478
      %v1486 = vmul.f32 %v1476, %v1478
      %v1487 = vadd.f32 %v1461, %v1479
      %v1488 = vadd.f32 %v1462, %v1480
      %v1489 = vadd.f32 %v1463, %v1481
      %v1490 = vadd.f32 %v1464, %v1482
      %v1491 = vadd.f32 %v1465, %v1483
      %v1492 = vadd.f32 %v1466, %v1484
      %v1493 = vadd.f32 %v1467, %v1485
      %v1494 = vadd.f32 %v1468, %v1486
      %1495 = vst.msk [vmem:[%s264 + $0x2] sm:$0xff] %vm253, %v1487
      %1496 = vst.msk [vmem:[%s264 + $0x12] sm:$0xff] %vm253, %v1488
      %1497 = vst.msk [vmem:[%s264 + $0x22] sm:$0xff] %vm253, %v1489
      %1498 = vst.msk [vmem:[%s264 + $0x32] sm:$0xff] %vm253, %v1490
      %1499 = vst.msk [vmem:[%s264 + $0x42] sm:$0xff] %vm253, %v1491
      %1500 = vst.msk [vmem:[%s264 + $0x52] sm:$0xff] %vm253, %v1492
      %1501 = vst.msk [vmem:[%s264 + $0x62] sm:$0xff] %vm253, %v1493
      %1502 = vst.msk [vmem:[%s264 + $0x72] sm:$0xff] %vm253, %v1494
      %v1503 = vld [vmem:[%s357 + $0x1] sm:$0xff]
      %v1504 = vld [vmem:[%s357 + $0x11] sm:$0xff]
      %v1505 = vld [vmem:[%s357 + $0x21] sm:$0xff]
      %v1506 = vld [vmem:[%s357 + $0x31] sm:$0xff]
      %v1507 = vld [vmem:[%s357 + $0x41] sm:$0xff]
      %v1508 = vld [vmem:[%s357 + $0x51] sm:$0xff]
      %v1509 = vld [vmem:[%s357 + $0x61] sm:$0xff]
      %v1510 = vld [vmem:[%s357 + $0x71] sm:$0xff]
      %v1511 = vld [vmem:[%s357 + $0x2] sm:$0xff]
      %v1512 = vld [vmem:[%s357 + $0x12] sm:$0xff]
      %v1513 = vld [vmem:[%s357 + $0x22] sm:$0xff]
      %v1514 = vld [vmem:[%s357 + $0x32] sm:$0xff]
      %v1515 = vld [vmem:[%s357 + $0x42] sm:$0xff]
      %v1516 = vld [vmem:[%s357 + $0x52] sm:$0xff]
      %v1517 = vld [vmem:[%s357 + $0x62] sm:$0xff]
      %v1518 = vld [vmem:[%s357 + $0x72] sm:$0xff]
      %v1519 = vld [vmem:[%s357 + $0x3] sm:$0xff]
      %v1520 = vld [vmem:[%s357 + $0x13] sm:$0xff]
      %v1521 = vld [vmem:[%s357 + $0x23] sm:$0xff]
      %v1522 = vld [vmem:[%s357 + $0x33] sm:$0xff]
      %v1523 = vld [vmem:[%s357 + $0x43] sm:$0xff]
      %v1524 = vld [vmem:[%s357 + $0x53] sm:$0xff]
      %v1525 = vld [vmem:[%s357 + $0x63] sm:$0xff]
      %v1526 = vld [vmem:[%s357 + $0x73] sm:$0xff]
      %v1527 = vld [vmem:[%s264 + $0x1] sm:$0xff]
      %v1528 = vld [vmem:[%s264 + $0x11] sm:$0xff]
      %v1529 = vld [vmem:[%s264 + $0x21] sm:$0xff]
      %v1530 = vld [vmem:[%s264 + $0x31] sm:$0xff]
      %v1531 = vld [vmem:[%s264 + $0x41] sm:$0xff]
      %v1532 = vld [vmem:[%s264 + $0x51] sm:$0xff]
      %v1533 = vld [vmem:[%s264 + $0x61] sm:$0xff]
      %v1534 = vld [vmem:[%s264 + $0x71] sm:$0xff]
      %v1535 = vld [vmem:[%s264 + $0x2] sm:$0xff]
      %v1536 = vld [vmem:[%s264 + $0x12] sm:$0xff]
      %v1537 = vld [vmem:[%s264 + $0x22] sm:$0xff]
      %v1538 = vld [vmem:[%s264 + $0x32] sm:$0xff]
      %v1539 = vld [vmem:[%s264 + $0x42] sm:$0xff]
      %v1540 = vld [vmem:[%s264 + $0x52] sm:$0xff]
      %v1541 = vld [vmem:[%s264 + $0x62] sm:$0xff]
      %v1542 = vld [vmem:[%s264 + $0x72] sm:$0xff]
      %v1543 = vld [vmem:[%s264 + $0x3] sm:$0xff]
      %v1544 = vld [vmem:[%s264 + $0x13] sm:$0xff]
      %v1545 = vld [vmem:[%s264 + $0x23] sm:$0xff]
      %v1546 = vld [vmem:[%s264 + $0x33] sm:$0xff]
      %v1547 = vld [vmem:[%s264 + $0x43] sm:$0xff]
      %v1548 = vld [vmem:[%s264 + $0x53] sm:$0xff]
      %v1549 = vld [vmem:[%s264 + $0x63] sm:$0xff]
      %v1550 = vld [vmem:[%s264 + $0x73] sm:$0xff]
      %v1551 = vld [vmem:[%s406 + $0x1] sm:$0xff]
      %v1552 = vld [vmem:[%s406 + $0x11] sm:$0xff]
      %v1553 = vld [vmem:[%s406 + $0x21] sm:$0xff]
      %v1554 = vld [vmem:[%s406 + $0x31] sm:$0xff]
      %v1555 = vld [vmem:[%s406 + $0x41] sm:$0xff]
      %v1556 = vld [vmem:[%s406 + $0x51] sm:$0xff]
      %v1557 = vld [vmem:[%s406 + $0x61] sm:$0xff]
      %v1558 = vld [vmem:[%s406 + $0x71] sm:$0xff]
      %v1559 = vld [vmem:[%s406 + $0x2] sm:$0xff]
      %v1560 = vld [vmem:[%s406 + $0x12] sm:$0xff]
      %v1561 = vld [vmem:[%s406 + $0x22] sm:$0xff]
      %v1562 = vld [vmem:[%s406 + $0x32] sm:$0xff]
      %v1563 = vld [vmem:[%s406 + $0x42] sm:$0xff]
      %v1564 = vld [vmem:[%s406 + $0x52] sm:$0xff]
      %v1565 = vld [vmem:[%s406 + $0x62] sm:$0xff]
      %v1566 = vld [vmem:[%s406 + $0x72] sm:$0xff]
      %v1567 = vld [vmem:[%s406 + $0x3] sm:$0xff]
      %v1568 = vld [vmem:[%s406 + $0x13] sm:$0xff]
      %v1569 = vld [vmem:[%s406 + $0x23] sm:$0xff]
      %v1570 = vld [vmem:[%s406 + $0x33] sm:$0xff]
      %v1571 = vld [vmem:[%s406 + $0x43] sm:$0xff]
      %v1572 = vld [vmem:[%s406 + $0x53] sm:$0xff]
      %v1573 = vld [vmem:[%s406 + $0x63] sm:$0xff]
      %v1574 = vld [vmem:[%s406 + $0x73] sm:$0xff]
      %1583 = vrot.lane.b32.xlu0 %v1511, 4
      %v1584 = vpop.permute.xlu0 %1583
      %1585 = vrot.lane.b32.xlu0 %v1512, 4
      %v1586 = vpop.permute.xlu0 %1585
      %1587 = vrot.lane.b32.xlu0 %v1513, 4
      %v1588 = vpop.permute.xlu0 %1587
      %1589 = vrot.lane.b32.xlu0 %v1514, 4
      %v1590 = vpop.permute.xlu0 %1589
      %1591 = vrot.lane.b32.xlu0 %v1515, 4
      %v1592 = vpop.permute.xlu0 %1591
      %1593 = vrot.lane.b32.xlu0 %v1516, 4
      %v1594 = vpop.permute.xlu0 %1593
      %1595 = vrot.lane.b32.xlu0 %v1517, 4
      %v1596 = vpop.permute.xlu0 %1595
      %1597 = vrot.lane.b32.xlu0 %v1518, 4
      %v1598 = vpop.permute.xlu0 %1597
      %1615 = vrot.lane.b32.xlu0 %v1519, 8
      %v1616 = vpop.permute.xlu0 %1615
      %1617 = vrot.lane.b32.xlu0 %v1520, 8
      %v1618 = vpop.permute.xlu0 %1617
      %1619 = vrot.lane.b32.xlu0 %v1521, 8
      %v1620 = vpop.permute.xlu0 %1619
      %1621 = vrot.lane.b32.xlu0 %v1522, 8
      %v1622 = vpop.permute.xlu0 %1621
      %1623 = vrot.lane.b32.xlu0 %v1523, 8
      %v1624 = vpop.permute.xlu0 %1623
      %1625 = vrot.lane.b32.xlu0 %v1524, 8
      %v1626 = vpop.permute.xlu0 %1625
      %1627 = vrot.lane.b32.xlu0 %v1525, 8
      %v1628 = vpop.permute.xlu0 %1627
      %1629 = vrot.lane.b32.xlu0 %v1526, 8
      %v1630 = vpop.permute.xlu0 %1629
      %1647 = vrot.lane.b32.xlu0 %v1527, 12
      %v1648 = vpop.permute.xlu0 %1647
      %1649 = vrot.lane.b32.xlu0 %v1528, 12
      %v1650 = vpop.permute.xlu0 %1649
      %1651 = vrot.lane.b32.xlu0 %v1529, 12
      %v1652 = vpop.permute.xlu0 %1651
      %1653 = vrot.lane.b32.xlu0 %v1530, 12
      %v1654 = vpop.permute.xlu0 %1653
      %1655 = vrot.lane.b32.xlu0 %v1531, 12
      %v1656 = vpop.permute.xlu0 %1655
      %1657 = vrot.lane.b32.xlu0 %v1532, 12
      %v1658 = vpop.permute.xlu0 %1657
      %1659 = vrot.lane.b32.xlu0 %v1533, 12
      %v1660 = vpop.permute.xlu0 %1659
      %1661 = vrot.lane.b32.xlu0 %v1534, 12
      %v1662 = vpop.permute.xlu0 %1661
      %1679 = vrot.lane.b32.xlu0 %v1535, 16
      %v1680 = vpop.permute.xlu0 %1679
      %1681 = vrot.lane.b32.xlu0 %v1536, 16
      %v1682 = vpop.permute.xlu0 %1681
      %1683 = vrot.lane.b32.xlu0 %v1537, 16
      %v1684 = vpop.permute.xlu0 %1683
      %1685 = vrot.lane.b32.xlu0 %v1538, 16
      %v1686 = vpop.permute.xlu0 %1685
      %1687 = vrot.lane.b32.xlu0 %v1539, 16
      %v1688 = vpop.permute.xlu0 %1687
      %1689 = vrot.lane.b32.xlu0 %v1540, 16
      %v1690 = vpop.permute.xlu0 %1689
      %1691 = vrot.lane.b32.xlu0 %v1541, 16
      %v1692 = vpop.permute.xlu0 %1691
      %1693 = vrot.lane.b32.xlu0 %v1542, 16
      %v1694 = vpop.permute.xlu0 %1693
      %1711 = vrot.lane.b32.xlu0 %v1543, 20
      %v1712 = vpop.permute.xlu0 %1711
      %1713 = vrot.lane.b32.xlu0 %v1544, 20
      %v1714 = vpop.permute.xlu0 %1713
      %1715 = vrot.lane.b32.xlu0 %v1545, 20
      %v1716 = vpop.permute.xlu0 %1715
      %1717 = vrot.lane.b32.xlu0 %v1546, 20
      %v1718 = vpop.permute.xlu0 %1717
      %1719 = vrot.lane.b32.xlu0 %v1547, 20
      %v1720 = vpop.permute.xlu0 %1719
      %1721 = vrot.lane.b32.xlu0 %v1548, 20
      %v1722 = vpop.permute.xlu0 %1721
      %1723 = vrot.lane.b32.xlu0 %v1549, 20
      %v1724 = vpop.permute.xlu0 %1723
      %1725 = vrot.lane.b32.xlu0 %v1550, 20
      %v1726 = vpop.permute.xlu0 %1725
      %1743 = vrot.lane.b32.xlu0 %v1551, 24
      %v1744 = vpop.permute.xlu0 %1743
      %1745 = vrot.lane.b32.xlu0 %v1552, 24
      %v1746 = vpop.permute.xlu0 %1745
      %1747 = vrot.lane.b32.xlu0 %v1553, 24
      %v1748 = vpop.permute.xlu0 %1747
      %1749 = vrot.lane.b32.xlu0 %v1554, 24
      %v1750 = vpop.permute.xlu0 %1749
      %1751 = vrot.lane.b32.xlu0 %v1555, 24
      %v1752 = vpop.permute.xlu0 %1751
      %1753 = vrot.lane.b32.xlu0 %v1556, 24
      %v1754 = vpop.permute.xlu0 %1753
      %1755 = vrot.lane.b32.xlu0 %v1557, 24
      %v1756 = vpop.permute.xlu0 %1755
      %1757 = vrot.lane.b32.xlu0 %v1558, 24
      %v1758 = vpop.permute.xlu0 %1757
      %1775 = vrot.lane.b32.xlu0 %v1559, 28
      %v1776 = vpop.permute.xlu0 %1775
      %1777 = vrot.lane.b32.xlu0 %v1560, 28
      %v1778 = vpop.permute.xlu0 %1777
      %1779 = vrot.lane.b32.xlu0 %v1561, 28
      %v1780 = vpop.permute.xlu0 %1779
      %1781 = vrot.lane.b32.xlu0 %v1562, 28
      %v1782 = vpop.permute.xlu0 %1781
      %1783 = vrot.lane.b32.xlu0 %v1563, 28
      %v1784 = vpop.permute.xlu0 %1783
      %1785 = vrot.lane.b32.xlu0 %v1564, 28
      %v1786 = vpop.permute.xlu0 %1785
      %1787 = vrot.lane.b32.xlu0 %v1565, 28
      %v1788 = vpop.permute.xlu0 %1787
      %1789 = vrot.lane.b32.xlu0 %v1566, 28
      %v1790 = vpop.permute.xlu0 %1789
      %1807 = vrot.lane.b32.xlu0 %v1567, 32
      %v1808 = vpop.permute.xlu0 %1807
      %1809 = vrot.lane.b32.xlu0 %v1568, 32
      %v1810 = vpop.permute.xlu0 %1809
      %1811 = vrot.lane.b32.xlu0 %v1569, 32
      %v1812 = vpop.permute.xlu0 %1811
      %1813 = vrot.lane.b32.xlu0 %v1570, 32
      %v1814 = vpop.permute.xlu0 %1813
      %1815 = vrot.lane.b32.xlu0 %v1571, 32
      %v1816 = vpop.permute.xlu0 %1815
      %1817 = vrot.lane.b32.xlu0 %v1572, 32
      %v1818 = vpop.permute.xlu0 %1817
      %1819 = vrot.lane.b32.xlu0 %v1573, 32
      %v1820 = vpop.permute.xlu0 %1819
      %1821 = vrot.lane.b32.xlu0 %v1574, 32
      %v1822 = vpop.permute.xlu0 %1821
      %v1831 = vsel %vm253, %v1503, %v1584
      %v1832 = vsel %vm253, %v1504, %v1586
      %v1833 = vsel %vm253, %v1505, %v1588
      %v1834 = vsel %vm253, %v1506, %v1590
      %v1835 = vsel %vm253, %v1507, %v1592
      %v1836 = vsel %vm253, %v1508, %v1594
      %v1837 = vsel %vm253, %v1509, %v1596
      %v1838 = vsel %vm253, %v1510, %v1598
      %v1839 = vsel %vm695, %v1831, %v1616
      %v1840 = vsel %vm695, %v1832, %v1618
      %v1841 = vsel %vm695, %v1833, %v1620
      %v1842 = vsel %vm695, %v1834, %v1622
      %v1843 = vsel %vm695, %v1835, %v1624
      %v1844 = vsel %vm695, %v1836, %v1626
      %v1845 = vsel %vm695, %v1837, %v1628
      %v1846 = vsel %vm695, %v1838, %v1630
      %v1847 = vsel %vm704, %v1839, %v1648
      %v1848 = vsel %vm704, %v1840, %v1650
      %v1849 = vsel %vm704, %v1841, %v1652
      %v1850 = vsel %vm704, %v1842, %v1654
      %v1851 = vsel %vm704, %v1843, %v1656
      %v1852 = vsel %vm704, %v1844, %v1658
      %v1853 = vsel %vm704, %v1845, %v1660
      %v1854 = vsel %vm704, %v1846, %v1662
      %v1855 = vsel %vm713, %v1847, %v1680
      %v1856 = vsel %vm713, %v1848, %v1682
      %v1857 = vsel %vm713, %v1849, %v1684
      %v1858 = vsel %vm713, %v1850, %v1686
      %v1859 = vsel %vm713, %v1851, %v1688
      %v1860 = vsel %vm713, %v1852, %v1690
      %v1861 = vsel %vm713, %v1853, %v1692
      %v1862 = vsel %vm713, %v1854, %v1694
      %v1863 = vsel %vm722, %v1855, %v1712
      %v1864 = vsel %vm722, %v1856, %v1714
      %v1865 = vsel %vm722, %v1857, %v1716
      %v1866 = vsel %vm722, %v1858, %v1718
      %v1867 = vsel %vm722, %v1859, %v1720
      %v1868 = vsel %vm722, %v1860, %v1722
      %v1869 = vsel %vm722, %v1861, %v1724
      %v1870 = vsel %vm722, %v1862, %v1726
      %v1871 = vsel %vm731, %v1863, %v1744
      %v1872 = vsel %vm731, %v1864, %v1746
      %v1873 = vsel %vm731, %v1865, %v1748
      %v1874 = vsel %vm731, %v1866, %v1750
      %v1875 = vsel %vm731, %v1867, %v1752
      %v1876 = vsel %vm731, %v1868, %v1754
      %v1877 = vsel %vm731, %v1869, %v1756
      %v1878 = vsel %vm731, %v1870, %v1758
      %v1879 = vsel %vm740, %v1871, %v1776
      %v1880 = vsel %vm740, %v1872, %v1778
      %v1881 = vsel %vm740, %v1873, %v1780
      %v1882 = vsel %vm740, %v1874, %v1782
      %v1883 = vsel %vm740, %v1875, %v1784
      %v1884 = vsel %vm740, %v1876, %v1786
      %v1885 = vsel %vm740, %v1877, %v1788
      %v1886 = vsel %vm740, %v1878, %v1790
      %v1887 = vsel %vm749, %v1879, %v1808
      %v1888 = vsel %vm749, %v1880, %v1810
      %v1889 = vsel %vm749, %v1881, %v1812
      %v1890 = vsel %vm749, %v1882, %v1814
      %v1891 = vsel %vm749, %v1883, %v1816
      %v1892 = vsel %vm749, %v1884, %v1818
      %v1893 = vsel %vm749, %v1885, %v1820
      %v1894 = vsel %vm749, %v1886, %v1822
      %v1895 = vpack.c.bf16 %v1888, %v1887
      %v1896 = vpack.c.bf16 %v1890, %v1889
      %v1897 = vpack.c.bf16 %v1892, %v1891
      %v1898 = vpack.c.bf16 %v1894, %v1893
      %v1899 = vld [vmem:[%s4] sm:$0xf]
      %v1900 = vld [vmem:[%s4 + $0x4] sm:$0xf]
      %v1901 = vld [vmem:[%s4 + $0x8] sm:$0xf]
      %v1902 = vld [vmem:[%s4 + $0xc] sm:$0xf]
      %v1903 = vld [vmem:[%s4 + $0x10] sm:$0x3]
      %v1904 = vld [vmem:[%s5] sm:$0x1]
      %v1906 = vperm.slane %v1904, 0
      %v1913 = vunpack.c.l.b16 %v1899
      %v1914 = vunpack.c.l.b16 %v1900
      %v1915 = vunpack.c.l.b16 %v1901
      %v1916 = vunpack.c.l.b16 %v1902
      %v1917 = vunpack.c.l.b16 %v1903
      %v1918 = vpack.c.b16 %v1914, %v1913
      %v1919 = vpack.c.b16 %v1916, %v1915
      %v1920 = vpack.c.b16 %v1917, %v1917
      %v1924 = vsel %vm786, %v1895, 0
      %v1927 = vsel %vm786, %v1896, 0
      %v1930 = vsel %vm786, %v1897, 0
      %v1933 = vsel %vm786, %v1898, 0
      %v1936 = vsel %vm799, %v1920, 0
      %1938 = vmatpush.bf16.msra.mxu0 0
      %1939 = vmatpush.bf16.msra.mxu0 0
      %1940 = vmatpush.bf16.msra.mxu0 0
      %1941 = vmatpush.bf16.msra.mxu0 0
      %1942 = vmatpush.bf16.msra.mxu0 0
      %1943 = vmatpush.bf16.msra.mxu0 %v1936
      %1944 = vmatpush.bf16.msra.mxu0 %v1919
      %1945 = vmatpush.bf16.msra.mxu0 %v1918
      %1946 = vmatmul.bf16.gmra.mxu0 %v1924
      %v1947 = vpop.f32.mrf.mxu0
      %v1948 = vadd.f32 %v1906, %v1947
      %v1949 = vpop.f32.mrf.mxu0
      %v1950 = vadd.f32 %v1906, %v1949
      %1951 = vmatmul.bf16.gmra.mxu0 %v1927
      %v1952 = vpop.f32.mrf.mxu0
      %v1953 = vadd.f32 %v1906, %v1952
      %v1954 = vpop.f32.mrf.mxu0
      %v1955 = vadd.f32 %v1906, %v1954
      %1956 = vmatmul.bf16.gmra.mxu0 %v1930
      %v1957 = vpop.f32.mrf.mxu0
      %v1958 = vadd.f32 %v1906, %v1957
      %v1959 = vpop.f32.mrf.mxu0
      %v1960 = vadd.f32 %v1906, %v1959
      %1961 = vmatmul.bf16.gmra.mxu0 %v1933
      %v1962 = vpop.f32.mrf.mxu0
      %v1963 = vadd.f32 %v1906, %v1962
      %v1964 = vpop.f32.mrf.mxu0
      %v1965 = vadd.f32 %v1906, %v1964
      %1966 = vdwg.mxu0
      %v1967 = vadd.f32 %v813, %v1948
      %v1968 = vadd.f32 %v815, %v1950
      %v1969 = vadd.f32 %v818, %v1953
      %v1970 = vadd.f32 %v820, %v1955
      %v1971 = vadd.f32 %v823, %v1958
      %v1972 = vadd.f32 %v825, %v1960
      %v1973 = vadd.f32 %v828, %v1963
      %v1974 = vadd.f32 %v830, %v1965
      %v1975 = vsub.f32 %v813, %v1948
      %v1976 = vsub.f32 %v815, %v1950
      %v1977 = vsub.f32 %v818, %v1953
      %v1978 = vsub.f32 %v820, %v1955
      %v1979 = vsub.f32 %v823, %v1958
      %v1980 = vsub.f32 %v825, %v1960
      %v1981 = vsub.f32 %v828, %v1963
      %v1982 = vsub.f32 %v830, %v1965
      %1991 = vrot.lane.b32.xlu0 %v1948, 124
      %v1992 = vpop.permute.xlu0 %1991
      %1993 = vrot.lane.b32.xlu0 %v1950, 124
      %v1994 = vpop.permute.xlu0 %1993
      %1995 = vrot.lane.b32.xlu0 %v1953, 124
      %v1996 = vpop.permute.xlu0 %1995
      %1997 = vrot.lane.b32.xlu0 %v1955, 124
      %v1998 = vpop.permute.xlu0 %1997
      %1999 = vrot.lane.b32.xlu0 %v1958, 124
      %v2000 = vpop.permute.xlu0 %1999
      %2001 = vrot.lane.b32.xlu0 %v1960, 124
      %v2002 = vpop.permute.xlu0 %2001
      %2003 = vrot.lane.b32.xlu0 %v1963, 124
      %v2004 = vpop.permute.xlu0 %2003
      %2005 = vrot.lane.b32.xlu0 %v1965, 124
      %v2006 = vpop.permute.xlu0 %2005
      %v2015 = vadd.f32 %v1967, %v1992
      %v2016 = vadd.f32 %v1968, %v1994
      %v2017 = vadd.f32 %v1969, %v1996
      %v2018 = vadd.f32 %v1970, %v1998
      %v2019 = vadd.f32 %v1971, %v2000
      %v2020 = vadd.f32 %v1972, %v2002
      %v2021 = vadd.f32 %v1973, %v2004
      %v2022 = vadd.f32 %v1974, %v2006
      %v2023 = vsub.f32 %v1967, %v1992
      %v2024 = vsub.f32 %v1968, %v1994
      %v2025 = vsub.f32 %v1969, %v1996
      %v2026 = vsub.f32 %v1970, %v1998
      %v2027 = vsub.f32 %v1971, %v2000
      %v2028 = vsub.f32 %v1972, %v2002
      %v2029 = vsub.f32 %v1973, %v2004
      %v2030 = vsub.f32 %v1974, %v2006
      %2031 = vrot.lane.b32.xlu0 %v1948, 120
      %v2032 = vpop.permute.xlu0 %2031
      %2033 = vrot.lane.b32.xlu0 %v1950, 120
      %v2034 = vpop.permute.xlu0 %2033
      %2035 = vrot.lane.b32.xlu0 %v1953, 120
      %v2036 = vpop.permute.xlu0 %2035
      %2037 = vrot.lane.b32.xlu0 %v1955, 120
      %v2038 = vpop.permute.xlu0 %2037
      %2039 = vrot.lane.b32.xlu0 %v1958, 120
      %v2040 = vpop.permute.xlu0 %2039
      %2041 = vrot.lane.b32.xlu0 %v1960, 120
      %v2042 = vpop.permute.xlu0 %2041
      %2043 = vrot.lane.b32.xlu0 %v1963, 120
      %v2044 = vpop.permute.xlu0 %2043
      %2045 = vrot.lane.b32.xlu0 %v1965, 120
      %v2046 = vpop.permute.xlu0 %2045
      %v2055 = vadd.f32 %v1975, %v2032
      %v2056 = vadd.f32 %v1976, %v2034
      %v2057 = vadd.f32 %v1977, %v2036
      %v2058 = vadd.f32 %v1978, %v2038
      %v2059 = vadd.f32 %v1979, %v2040
      %v2060 = vadd.f32 %v1980, %v2042
      %v2061 = vadd.f32 %v1981, %v2044
      %v2062 = vadd.f32 %v1982, %v2046
      %v2063 = vsub.f32 %v1975, %v2032
      %v2064 = vsub.f32 %v1976, %v2034
      %v2065 = vsub.f32 %v1977, %v2036
      %v2066 = vsub.f32 %v1978, %v2038
      %v2067 = vsub.f32 %v1979, %v2040
      %v2068 = vsub.f32 %v1980, %v2042
      %v2069 = vsub.f32 %v1981, %v2044
      %v2070 = vsub.f32 %v1982, %v2046
      %2079 = vrot.lane.b32.xlu0 %v2023, 4
      %v2080 = vpop.permute.xlu0 %2079
      %2081 = vrot.lane.b32.xlu0 %v2024, 4
      %v2082 = vpop.permute.xlu0 %2081
      %2083 = vrot.lane.b32.xlu0 %v2025, 4
      %v2084 = vpop.permute.xlu0 %2083
      %2085 = vrot.lane.b32.xlu0 %v2026, 4
      %v2086 = vpop.permute.xlu0 %2085
      %2087 = vrot.lane.b32.xlu0 %v2027, 4
      %v2088 = vpop.permute.xlu0 %2087
      %2089 = vrot.lane.b32.xlu0 %v2028, 4
      %v2090 = vpop.permute.xlu0 %2089
      %2091 = vrot.lane.b32.xlu0 %v2029, 4
      %v2092 = vpop.permute.xlu0 %2091
      %2093 = vrot.lane.b32.xlu0 %v2030, 4
      %v2094 = vpop.permute.xlu0 %2093
      %2111 = vrot.lane.b32.xlu0 %v2055, 8
      %v2112 = vpop.permute.xlu0 %2111
      %2113 = vrot.lane.b32.xlu0 %v2056, 8
      %v2114 = vpop.permute.xlu0 %2113
      %2115 = vrot.lane.b32.xlu0 %v2057, 8
      %v2116 = vpop.permute.xlu0 %2115
      %2117 = vrot.lane.b32.xlu0 %v2058, 8
      %v2118 = vpop.permute.xlu0 %2117
      %2119 = vrot.lane.b32.xlu0 %v2059, 8
      %v2120 = vpop.permute.xlu0 %2119
      %2121 = vrot.lane.b32.xlu0 %v2060, 8
      %v2122 = vpop.permute.xlu0 %2121
      %2123 = vrot.lane.b32.xlu0 %v2061, 8
      %v2124 = vpop.permute.xlu0 %2123
      %2125 = vrot.lane.b32.xlu0 %v2062, 8
      %v2126 = vpop.permute.xlu0 %2125
      %2143 = vrot.lane.b32.xlu0 %v2063, 12
      %v2144 = vpop.permute.xlu0 %2143
      %2145 = vrot.lane.b32.xlu0 %v2064, 12
      %v2146 = vpop.permute.xlu0 %2145
      %2147 = vrot.lane.b32.xlu0 %v2065, 12
      %v2148 = vpop.permute.xlu0 %2147
      %2149 = vrot.lane.b32.xlu0 %v2066, 12
      %v2150 = vpop.permute.xlu0 %2149
      %2151 = vrot.lane.b32.xlu0 %v2067, 12
      %v2152 = vpop.permute.xlu0 %2151
      %2153 = vrot.lane.b32.xlu0 %v2068, 12
      %v2154 = vpop.permute.xlu0 %2153
      %2155 = vrot.lane.b32.xlu0 %v2069, 12
      %v2156 = vpop.permute.xlu0 %2155
      %2157 = vrot.lane.b32.xlu0 %v2070, 12
      %v2158 = vpop.permute.xlu0 %2157
      %v2167 = vsel %vm253, %v2015, %v2080
      %v2168 = vsel %vm253, %v2016, %v2082
      %v2169 = vsel %vm253, %v2017, %v2084
      %v2170 = vsel %vm253, %v2018, %v2086
      %v2171 = vsel %vm253, %v2019, %v2088
      %v2172 = vsel %vm253, %v2020, %v2090
      %v2173 = vsel %vm253, %v2021, %v2092
      %v2174 = vsel %vm253, %v2022, %v2094
      %v2175 = vsel %vm695, %v2167, %v2112
      %v2176 = vsel %vm695, %v2168, %v2114
      %v2177 = vsel %vm695, %v2169, %v2116
      %v2178 = vsel %vm695, %v2170, %v2118
      %v2179 = vsel %vm695, %v2171, %v2120
      %v2180 = vsel %vm695, %v2172, %v2122
      %v2181 = vsel %vm695, %v2173, %v2124
      %v2182 = vsel %vm695, %v2174, %v2126
      %v2183 = vsel %vm704, %v2175, %v2144
      %v2184 = vsel %vm704, %v2176, %v2146
      %v2185 = vsel %vm704, %v2177, %v2148
      %v2186 = vsel %vm704, %v2178, %v2150
      %v2187 = vsel %vm704, %v2179, %v2152
      %v2188 = vsel %vm704, %v2180, %v2154
      %v2189 = vsel %vm704, %v2181, %v2156
      %v2190 = vsel %vm704, %v2182, %v2158
      %2191 = vst.msk [vmem:[%s251] sm:$0xff] %vm713, %v2183
      %2192 = vst.msk [vmem:[%s251 + $0x8] sm:$0xff] %vm713, %v2184
      %2193 = vst.msk [vmem:[%s251 + $0x10] sm:$0xff] %vm713, %v2185
      %2194 = vst.msk [vmem:[%s251 + $0x18] sm:$0xff] %vm713, %v2186
      %2195 = vst.msk [vmem:[%s251 + $0x20] sm:$0xff] %vm713, %v2187
      %2196 = vst.msk [vmem:[%s251 + $0x28] sm:$0xff] %vm713, %v2188
      %2197 = vst.msk [vmem:[%s251 + $0x30] sm:$0xff] %vm713, %v2189
      %2198 = vst.msk [vmem:[%s251 + $0x38] sm:$0xff] %vm713, %v2190
      %p2199 = scmp.lt.s32.totalorder %s17, 1
      %s2200 = scalar_select %p2199, %s17, 1
      %s2201 = smul.addr %s2200, 8
      %s2202 = smul.addr %s2201, 8
      %s2203 = scalar_lea.vmem %s6, %s2202
      // Predicated region
      $region45: #{tpu_custom_call.1} parent=43 // pred_check
        %p2204 = pneg %p166
      $region46: #{tpu_custom_call.1} parent=43 // pred_check_branch
        %2206 = sbr.rel (%p2204) target = $region48
      $region47: #{tpu_custom_call.1} parent=43 // pred_region
        _
      $region48: #{tpu_custom_call.1} parent=43 // pred_fallthru
        _
    $region44: #{tpu_custom_call.1} parent=5 // pred_fallthru
      _
    %p2207 = scmp.le.s32.totalorder 2, %s12
    // Predicated region
    $region49: #{tpu_custom_call.1} parent=5 // pred_check
      %p2208 = pneg %p2207
    $region50: #{tpu_custom_call.1} parent=5 // pred_check_branch
      %2210 = sbr.rel (%p2208) target = $region52
    $region51: #{tpu_custom_call.1} parent=5 // pred_region
      %s2211 = ssub.s32 %s12, 2
      // Predicated region
      $region53: #{tpu_custom_call.1} parent=51 // pred_check
        %p2212 = pneg %p172
      $region54: #{tpu_custom_call.1} parent=51 // pred_check_branch
        %2214 = sbr.rel (%p2212) target = $region56
      $region55: #{tpu_custom_call.1} parent=51 // pred_region
        %p2215 = scmp.lt.s32.totalorder %s18, 1
        %s2216 = scalar_select %p2215, %s18, 1
        %s2217 = smul.addr %s2216, 8
        %s2218 = smul.addr %s2217, 8
        %s2219 = scalar_lea.vmem %s6, %s2218
      $region56: #{tpu_custom_call.1} parent=51 // pred_fallthru
        _
    $region52: #{tpu_custom_call.1} parent=5 // pred_fallthru
      _
  $region6: #{tpu_custom_call.1} parent=0 // loop_footer
    %s16 = sadd.s32 1, %s12
  $region7: #{tpu_custom_call.1} parent=0 // loop_footer_branch
    %11 = sbr.rel target = $region3
  $region8: #{tpu_custom_call.1} parent=0 // loop_exit
    _

</llo_original>
